<compile_context>
chip_gen: v7x
topology: tpu7x:2x2x1
jax: 0.10.0
libtpu: 0.0.40
codegen_flags: <defaults>
</compile_context>

<pallas_src>
import jax
import jax.numpy as jnp
from jax.experimental import pallas as pl
from jax.experimental.pallas import tpu as pltpu


def _round_up(x, m):
    return ((x + m - 1) // m) * m


def _default_tile_m():
    """Per-generation batch-tile target (arithmetic intensity ~tm flops/byte)."""
    try:
        kind = jax.devices()[0].device_kind.lower()
    except Exception:
        return 256
    if "v6" in kind:
        return 512      # v6e ridge ~650-700 bf16 flops/byte, 128 MiB VMEM
    if "v5" in kind:
        return 256      # v5e ridge ~240; keep footprint under 128 MiB / small scoped
    if "7" in kind:
        return 384      # v7x ridge ~310, only 64 MiB VMEM per TC
    return 256


# ---------------------------------------------------------------------------
# Kernel A: single K tile (w1 fully VMEM-resident). 1-D grid over batch tiles,
# no accumulator scratch, no pl.when phases.
# ---------------------------------------------------------------------------
def _disc_kernel_fused(x_ref, w1_ref, b1_ref, w2_ref, b2_ref, w3_ref, b3_ref,
                       o_ref):
    # Layer 1: bf16 MXU operands, f32 accumulation.
    h1 = jnp.dot(x_ref[...], w1_ref[...],
                 preferred_element_type=jnp.float32) + b1_ref[...]
    h1 = jnp.where(h1 > 0, h1, 0.2 * h1)                 # LeakyReLU(0.2), VPU

    # Layer 2.
    h2 = jnp.dot(h1.astype(jnp.bfloat16), w2_ref[...],
                 preferred_element_type=jnp.float32) + b2_ref[...]
    h2 = jnp.where(h2 > 0, h2, 0.2 * h2)                 # LeakyReLU(0.2), VPU

    # Layer 3 (256 -> 1): a (256,1) RHS would leave >99% of the MXU idle,
    # so run it as VPU multiply + XLU lane reduction.
    h3 = jnp.sum(h2 * w3_ref[...], axis=-1, keepdims=True) + b3_ref[0, 0]

    # Sigmoid: exp + approximate reciprocal both ride the EUP slot.
    o_ref[...] = pl.reciprocal(1.0 + jnp.exp(-h3), approx=True)


# ---------------------------------------------------------------------------
# Kernel B: K-tiled layer 1 (large D). grid = (batch_tiles, k_tiles),
# f32 accumulator scratch, MLP epilogue on the last K slab.
# ---------------------------------------------------------------------------
def _disc_kernel_ktiled(x_ref, w1_ref, b1_ref, w2_ref, b2_ref, w3_ref, b3_ref,
                        o_ref, h1_acc):
    k = pl.program_id(1)

    @pl.when(k == 0)
    def _():
        h1_acc[...] = jnp.zeros_like(h1_acc)

    h1_acc[...] += jnp.dot(x_ref[...], w1_ref[...],
                           preferred_element_type=jnp.float32)

    @pl.when(k == pl.num_programs(1) - 1)
    def _():
        h1 = h1_acc[...] + b1_ref[...]
        h1 = jnp.where(h1 > 0, h1, 0.2 * h1)

        h2 = jnp.dot(h1.astype(jnp.bfloat16), w2_ref[...],
                     preferred_element_type=jnp.float32) + b2_ref[...]
        h2 = jnp.where(h2 > 0, h2, 0.2 * h2)

        h3 = jnp.sum(h2 * w3_ref[...], axis=-1, keepdims=True) + b3_ref[0, 0]
        o_ref[...] = pl.reciprocal(1.0 + jnp.exp(-h3), approx=True)


def discriminator_forward(img, params, *, tile_m=None, tile_k=2048,
                          resident_w1_bytes=8 << 20):
    """img: (N, C, H, W) float32. Returns (N, 1) validity in [0, 1]."""
    w1, b1, w2, b2, w3, b3 = params
    n = img.shape[0]
    d = w1.shape[0]
    h1_dim = w1.shape[1]          # 512
    h2_dim = w2.shape[1]          # 256

    x = img.reshape(n, -1).astype(jnp.float32)            # flatten NCHW -> (N, D)
    assert x.shape[1] == d

    if tile_m is None:
        tile_m = _default_tile_m()

    # ---- K tiling: keep w1 resident when it fits, else stream fixed slabs. ---
    d_pad = _round_up(d, 128)
    if d_pad * h1_dim * 2 <= resident_w1_bytes:
        tk = d_pad                                        # single tile, w1 resident
    else:
        tk = _round_up(min(tile_k, d_pad), 128)
        d_pad = _round_up(d_pad, tk)                      # pad up to a multiple of tk
    k_tiles = d_pad // tk

    if d_pad != d:                                        # zero pad: no effect on dot
        x = jnp.pad(x, ((0, 0), (0, d_pad - d)))
        w1 = jnp.pad(w1, ((0, d_pad - d), (0, 0)))

    # ---- Batch tiling (multiple of 16 sublanes for bf16 packing). ------------
    tm = min(tile_m, _round_up(max(n, 1), 16))
    if n >= 256 and _round_up(n, tm) // tm < 2:
        # Large batch but only one tile: split so both v7x TensorCores get work.
        tm = _round_up(pl.cdiv(n, 2), 16)
    n_pad = _round_up(n, tm)
    if n_pad != n:
        x = jnp.pad(x, ((0, n_pad - n), (0, 0)))
    m_tiles = n_pad // tm

    # ---- Operand staging: bf16 MXU operands, f32 everywhere else. ------------
    x_bf = x.astype(jnp.bfloat16)                         # halves x HBM traffic
    w1_bf = w1.astype(jnp.bfloat16)
    w2_bf = w2.astype(jnp.bfloat16)
    b1_r = b1.reshape(1, h1_dim).astype(jnp.float32)
    b2_r = b2.reshape(1, h2_dim).astype(jnp.float32)
    w3_row = w3.reshape(1, h2_dim).astype(jnp.float32)    # used on the VPU
    b3_s = b3.reshape(1, 1).astype(jnp.float32)           # scalar -> SMEM

    # ---- Explicit VMEM budget (double buffers) -> vmem_limit_bytes. ----------
    vmem_bytes = (
        2 * tm * tk * 2                  # x block, bf16, double-buffered
        + 2 * tk * h1_dim * 2            # w1 block, bf16
        + 2 * h1_dim * h2_dim * 2        # w2 resident, bf16
        + 2 * (h1_dim + 2 * h2_dim) * 4  # b1, b2, w3 row
        + 2 * tm * 128 * 4               # (tm,1) output block (lane padded)
        + (tm * h1_dim * 4 if k_tiles > 1 else 0)   # h1 accumulator scratch
    )
    vmem_limit = min(max(vmem_bytes + (4 << 20), 32 << 20), 64 << 20)

    # ---- Advisory cost estimate (w1 re-read once per batch tile when tiled). --
    w1_reads = 1 if k_tiles == 1 else m_tiles
    cost = pl.CostEstimate(
        flops=2 * n_pad * (d_pad * h1_dim + h1_dim * h2_dim + h2_dim),
        transcendentals=n_pad,
        bytes_accessed=(x_bf.size * 2 + w1_reads * w1_bf.size * 2
                        + w2_bf.size * 2 + b1_r.size * 4 + b2_r.size * 4
                        + w3_row.size * 4 + 4 + n_pad * 4),
    )

    if k_tiles == 1:
        out = pl.pallas_call(
            _disc_kernel_fused,
            out_shape=jax.ShapeDtypeStruct((n_pad, 1), jnp.float32),
            grid=(m_tiles,),
            in_specs=[
                pl.BlockSpec((tm, tk), lambda i: (i, 0)),          # x: streams
                pl.BlockSpec((tk, h1_dim), lambda i: (0, 0)),      # w1: resident
                pl.BlockSpec((1, h1_dim), lambda i: (0, 0)),       # b1: resident
                pl.BlockSpec((h1_dim, h2_dim), lambda i: (0, 0)),  # w2: resident
                pl.BlockSpec((1, h2_dim), lambda i: (0, 0)),       # b2: resident
                pl.BlockSpec((1, h2_dim), lambda i: (0, 0)),       # w3 row
                pl.BlockSpec(memory_space=pltpu.MemorySpace.SMEM), # b3 scalar
            ],
            out_specs=pl.BlockSpec((tm, 1), lambda i: (i, 0)),
            compiler_params=pltpu.CompilerParams(
                dimension_semantics=("parallel",),
                vmem_limit_bytes=vmem_limit,
            ),
            cost_estimate=cost,
        )(x_bf, w1_bf, b1_r, w2_bf, b2_r, w3_row, b3_s)
    else:
        out = pl.pallas_call(
            _disc_kernel_ktiled,
            out_shape=jax.ShapeDtypeStruct((n_pad, 1), jnp.float32),
            grid=(m_tiles, k_tiles),
            in_specs=[
                pl.BlockSpec((tm, tk), lambda i, k: (i, k)),           # x: streams
                pl.BlockSpec((tk, h1_dim), lambda i, k: (k, 0)),       # w1: K-tiled
                pl.BlockSpec((1, h1_dim), lambda i, k: (0, 0)),        # b1
                pl.BlockSpec((h1_dim, h2_dim), lambda i, k: (0, 0)),   # w2
                pl.BlockSpec((1, h2_dim), lambda i, k: (0, 0)),        # b2
                pl.BlockSpec((1, h2_dim), lambda i, k: (0, 0)),        # w3 row
                pl.BlockSpec(memory_space=pltpu.MemorySpace.SMEM),     # b3 scalar
            ],
            out_specs=pl.BlockSpec((tm, 1), lambda i, k: (i, 0)),
            scratch_shapes=[pltpu.VMEM((tm, h1_dim), jnp.float32)],    # h1 acc
            compiler_params=pltpu.CompilerParams(
                dimension_semantics=("parallel", "arbitrary"),
                vmem_limit_bytes=vmem_limit,
            ),
            cost_estimate=cost,
        )(x_bf, w1_bf, b1_r, w2_bf, b2_r, w3_row, b3_s)

    return out[:n]


def init_params(key, in_dim):
    """Deterministic PyTorch-Linear-style init: U(-1/sqrt(fan_in), 1/sqrt(fan_in))."""
    dims = [(in_dim, 512), (512, 256), (256, 1)]
    params = []
    for fan_in, fan_out in dims:
        kw, kb, key = jax.random.split(key, 3)
        bound = 1.0 / (fan_in ** 0.5)
        w = jax.random.uniform(kw, (fan_in, fan_out), jnp.float32, -bound, bound)
        b = jax.random.uniform(kb, (1, fan_out), jnp.float32, -bound, bound)
        params.extend([w, b])
    return tuple(params)


def _reference_forward(img, params):
    """Pure-JAX f32 reference of the PyTorch module."""
    w1, b1, w2, b2, w3, b3 = params
    x = img.reshape(img.shape[0], -1)
    h1 = x @ w1 + b1
    h1 = jnp.where(h1 > 0, h1, 0.2 * h1)
    h2 = h1 @ w2 + b2
    h2 = jnp.where(h2 > 0, h2, 0.2 * h2)
    return jax.nn.sigmoid(h2 @ w3 + b3)


if __name__ == "__main__":
    # Small shapes consistent with the module: batch=2, channels=4, img_size=16.
    N, C, H, W = 2, 4, 16, 16
    D = C * H * W

    key = jax.random.PRNGKey(0)
    k_img, k_par = jax.random.split(key)
    img = jax.random.normal(k_img, (N, C, H, W), jnp.float32)
    params = init_params(k_par, D)

    out = discriminator_forward(img, params)
    out = jax.block_until_ready(out)

    ref = _reference_forward(img, params)

    assert out.shape == (N, 1)
    assert bool(jnp.all((out >= 0.0) & (out <= 1.0)))
    # bf16 MXU operands + approx reciprocal => small tolerance vs f32 reference.
    assert bool(jnp.allclose(out, ref, atol=2e-2)), (
        f"max diff {float(jnp.max(jnp.abs(out - ref)))}")
    print("KERNEL_OK")
</pallas_src>

<mosaic_0001>
module attributes {stable_mosaic.version = 11 : i64} {
  func.func @_disc_kernel_fused(%arg0: i32, %arg1: memref<16x1024xbf16, #tpu.memory_space<vmem>>, %arg2: memref<1024x512xbf16, #tpu.memory_space<vmem>>, %arg3: memref<1x512xf32, #tpu.memory_space<vmem>>, %arg4: memref<512x256xbf16, #tpu.memory_space<vmem>>, %arg5: memref<1x256xf32, #tpu.memory_space<vmem>>, %arg6: memref<1x256xf32, #tpu.memory_space<vmem>>, %arg7: memref<1x1xf32, #tpu.memory_space<smem>>, %arg8: memref<16x1xf32, #tpu.memory_space<vmem>>) attributes {dimension_semantics = [#tpu.dimension_semantics<parallel>], iteration_bounds = array<i64: 1>, scalar_prefetch = 0 : i64, scratch_operands = 0 : i64, tpu.core_type = #tpu.core_type<tc>, window_params = [{transform_indices = @transform_0, window_bounds = array<i64: 16, 1024>}, {pipeline_mode = #tpu.pipeline_mode<synchronous>, transform_indices = @transform_1, window_bounds = array<i64: 1024, 512>}, {pipeline_mode = #tpu.pipeline_mode<synchronous>, transform_indices = @transform_2, window_bounds = array<i64: 1, 512>}, {pipeline_mode = #tpu.pipeline_mode<synchronous>, transform_indices = @transform_3, window_bounds = array<i64: 512, 256>}, {pipeline_mode = #tpu.pipeline_mode<synchronous>, transform_indices = @transform_4, window_bounds = array<i64: 1, 256>}, {pipeline_mode = #tpu.pipeline_mode<synchronous>, transform_indices = @transform_5, window_bounds = array<i64: 1, 256>}, {transform_indices = @transform_6, window_bounds = array<i64: 1, 1>}, {transform_indices = @transform_7, window_bounds = array<i64: 16, 1>}]} {
    %c0 = arith.constant 0 : index
    %c0_0 = arith.constant 0 : index
    %0 = vector.load %arg1[%c0, %c0_0] : memref<16x1024xbf16, #tpu.memory_space<vmem>>, vector<16x1024xbf16>
    %c0_1 = arith.constant 0 : index
    %c0_2 = arith.constant 0 : index
    %1 = vector.load %arg2[%c0_1, %c0_2] : memref<1024x512xbf16, #tpu.memory_space<vmem>>, vector<1024x512xbf16>
    %cst = arith.constant dense<0.000000e+00> : vector<16x512xf32>
    %2 = tpu.matmul %0, %1, %cst {dimension_numbers = #tpu.dot_dimension_numbers<[1], [0], [0], [1], [0, 0, 1, 1], [], []>} : vector<16x1024xbf16>, vector<1024x512xbf16>, vector<16x512xf32> -> vector<16x512xf32>
    %c0_3 = arith.constant 0 : index
    %c0_4 = arith.constant 0 : index
    %3 = vector.load %arg3[%c0_3, %c0_4] : memref<1x512xf32, #tpu.memory_space<vmem>>, vector<1x512xf32>
    %4 = vector.broadcast %3 : vector<1x512xf32> to vector<16x512xf32>
    %5 = arith.addf %2, %4 : vector<16x512xf32>
    %cst_5 = arith.constant 0.000000e+00 : f32
    %6 = vector.broadcast %cst_5 : f32 to vector<16x512xf32>
    %7 = arith.cmpf ogt, %5, %6 : vector<16x512xf32>
    %cst_6 = arith.constant 2.000000e-01 : f32
    %8 = vector.broadcast %cst_6 : f32 to vector<16x512xf32>
    %9 = arith.mulf %8, %5 : vector<16x512xf32>
    %10 = arith.select %7, %5, %9 : vector<16x512xi1>, vector<16x512xf32>
    %11 = arith.truncf %10 : vector<16x512xf32> to vector<16x512xbf16>
    %c0_7 = arith.constant 0 : index
    %c0_8 = arith.constant 0 : index
    %12 = vector.load %arg4[%c0_7, %c0_8] : memref<512x256xbf16, #tpu.memory_space<vmem>>, vector<512x256xbf16>
    %cst_9 = arith.constant dense<0.000000e+00> : vector<16x256xf32>
    %13 = tpu.matmul %11, %12, %cst_9 {dimension_numbers = #tpu.dot_dimension_numbers<[1], [0], [0], [1], [0, 0, 1, 1], [], []>} : vector<16x512xbf16>, vector<512x256xbf16>, vector<16x256xf32> -> vector<16x256xf32>
    %c0_10 = arith.constant 0 : index
    %c0_11 = arith.constant 0 : index
    %14 = vector.load %arg5[%c0_10, %c0_11] : memref<1x256xf32, #tpu.memory_space<vmem>>, vector<1x256xf32>
    %15 = vector.broadcast %14 : vector<1x256xf32> to vector<16x256xf32>
    %16 = arith.addf %13, %15 : vector<16x256xf32>
    %cst_12 = arith.constant 0.000000e+00 : f32
    %17 = vector.broadcast %cst_12 : f32 to vector<16x256xf32>
    %18 = arith.cmpf ogt, %16, %17 : vector<16x256xf32>
    %cst_13 = arith.constant 2.000000e-01 : f32
    %19 = vector.broadcast %cst_13 : f32 to vector<16x256xf32>
    %20 = arith.mulf %19, %16 : vector<16x256xf32>
    %21 = arith.select %18, %16, %20 : vector<16x256xi1>, vector<16x256xf32>
    %c0_14 = arith.constant 0 : index
    %c0_15 = arith.constant 0 : index
    %22 = vector.load %arg6[%c0_14, %c0_15] : memref<1x256xf32, #tpu.memory_space<vmem>>, vector<1x256xf32>
    %23 = vector.broadcast %22 : vector<1x256xf32> to vector<16x256xf32>
    %24 = arith.mulf %21, %23 : vector<16x256xf32>
    %cst_16 = arith.constant dense<0.000000e+00> : vector<16xf32>
    %25 = vector.multi_reduction <add>, %24, %cst_16 [1] : vector<16x256xf32> to vector<16xf32>
    %26 = vector.shape_cast %25 : vector<16xf32> to vector<16x1xf32>
    %c0_17 = arith.constant 0 : index
    %c0_18 = arith.constant 0 : index
    %27 = memref.load %arg7[%c0_17, %c0_18] : memref<1x1xf32, #tpu.memory_space<smem>>
    %28 = vector.broadcast %27 : f32 to vector<16x1xf32>
    %29 = arith.addf %26, %28 : vector<16x1xf32>
    %cst_19 = arith.constant 0.000000e+00 : f32
    %30 = vector.broadcast %cst_19 : f32 to vector<16x1xf32>
    %31 = arith.subf %30, %29 : vector<16x1xf32>
    %32 = math.exp %31 : vector<16x1xf32>
    %cst_20 = arith.constant 1.000000e+00 : f32
    %33 = vector.broadcast %cst_20 : f32 to vector<16x1xf32>
    %34 = arith.addf %33, %32 : vector<16x1xf32>
    %35 = tpu.reciprocal %34 {approx = true} : vector<16x1xf32> -> vector<16x1xf32>
    %c0_21 = arith.constant 0 : index
    %c0_22 = arith.constant 0 : index
    %36 = vector.load %arg8[%c0_21, %c0_22] : memref<16x1xf32, #tpu.memory_space<vmem>>, vector<16x1xf32>
    tpu.vector_store %arg8[%c0_21, %c0_22], %35 {strides = array<i32>} : memref<16x1xf32, #tpu.memory_space<vmem>>, vector<16x1xf32>,
    return
  }
  func.func @transform_0(%arg0: i32) -> (i32, i32) {
    %c0_i32 = arith.constant 0 : i32
    %c0_i32_0 = arith.constant 0 : i32
    return %arg0, %c0_i32 : i32, i32
  }
  func.func @transform_1(%arg0: i32) -> (i32, i32) {
    %c0_i32 = arith.constant 0 : i32
    %c0_i32_0 = arith.constant 0 : i32
    %c0_i32_1 = arith.constant 0 : i32
    return %c0_i32, %c0_i32_0 : i32, i32
  }
  func.func @transform_2(%arg0: i32) -> (i32, i32) {
    %c0_i32 = arith.constant 0 : i32
    %c0_i32_0 = arith.constant 0 : i32
    %c0_i32_1 = arith.constant 0 : i32
    return %c0_i32, %c0_i32_0 : i32, i32
  }
  func.func @transform_3(%arg0: i32) -> (i32, i32) {
    %c0_i32 = arith.constant 0 : i32
    %c0_i32_0 = arith.constant 0 : i32
    %c0_i32_1 = arith.constant 0 : i32
    return %c0_i32, %c0_i32_0 : i32, i32
  }
  func.func @transform_4(%arg0: i32) -> (i32, i32) {
    %c0_i32 = arith.constant 0 : i32
    %c0_i32_0 = arith.constant 0 : i32
    %c0_i32_1 = arith.constant 0 : i32
    return %c0_i32, %c0_i32_0 : i32, i32
  }
  func.func @transform_5(%arg0: i32) -> (i32, i32) {
    %c0_i32 = arith.constant 0 : i32
    %c0_i32_0 = arith.constant 0 : i32
    %c0_i32_1 = arith.constant 0 : i32
    return %c0_i32, %c0_i32_0 : i32, i32
  }
  func.func @transform_6(%arg0: i32) -> (i32, i32) {
    %c0_i32 = arith.constant 0 : i32
    %c0_i32_0 = arith.constant 0 : i32
    %c0_i32_1 = arith.constant 0 : i32
    return %c0_i32, %c0_i32_0 : i32, i32
  }
  func.func @transform_7(%arg0: i32) -> (i32, i32) {
    %c0_i32 = arith.constant 0 : i32
    %c0_i32_0 = arith.constant 0 : i32
    return %arg0, %c0_i32 : i32, i32
  }
}

</mosaic_0001>

<llo_original>
// kernel: tpu_custom_call.1
$region0: #{tpu_custom_call.1}
  #allocation0 [shape = 'u32[]', space=smem, size = 0x4, offset = 0x4, fixed_abs, tag = 'smem constant byte address 0x4 - core index']
  #allocation1 [shape = 'u32[144,128]{1,0:T(1,128)}', space=vmem, size = 0x12000, scoped, tag = 'internal scratch']
  #allocation2 [shape = 'f32[1,1]{1,0:T(1,128)S(6)}', space=smem, size = 0x200, scoped, tag = 'scoped memory for tpu_custom_call.1']
  %s0 = inlined_call_operand.hbm [shape: bf16[16,1024], index: 0, kind: input, shape index: {}]
  %s1 = inlined_call_operand.hbm [shape: bf16[1024,512], index: 1, kind: input, shape index: {}]
  %s2 = inlined_call_operand.vmem [shape: f32[1,512], index: 2, kind: input, shape index: {}]
  %s3 = inlined_call_operand.hbm [shape: bf16[512,256], index: 3, kind: input, shape index: {}]
  %s4 = inlined_call_operand.vmem [shape: f32[1,256], index: 4, kind: input, shape index: {}]
  %s5 = inlined_call_operand.vmem [shape: f32[1,256], index: 5, kind: input, shape index: {}]
  %s6 = inlined_call_operand.<no memory space> [shape: f32[1,1], index: 6, kind: input, shape index: {}]
  %s7 = inlined_call_operand.vmem [shape: f32[16,1], index: 7, kind: output, shape index: {}]
  %s8 = sld [smem:[#allocation0]]
  $region50: #{tpu_custom_call.1} parent=0
    _
  %s10 = ssub.s32 1, %s8
  %s11 = scalar_select 0, %s10, %s8
  %12 = sst [smem:[#allocation2]] %s6
  $region1: #{tpu_custom_call.1} parent=0
    #allocation3 [shape = 'u8[32768]{0}', space=vmem, size = 0x8000, scoped, tag = 'input window, operand 0, single buffered']
    #allocation4 [shape = 's32[1]{0}', space=sflag, size = 0x4, scoped, tag = 'scoped memory for tpu_custom_call.1']
    #allocation5 [shape = 'u8[1048576]{0}', space=vmem, size = 0x100000, scoped, tag = 'input window, operand 1, single buffered']
    #allocation6 [shape = 's32[1]{0}', space=sflag, size = 0x4, scoped, tag = 'scoped memory for tpu_custom_call.1']
    #allocation7 [shape = 'u8[262144]{0}', space=vmem, size = 0x40000, scoped, tag = 'input window, operand 3, single buffered']
    %13 = vsyncpa [#allocation4], 0
    %14 = vsyncpa [#allocation6], 0
    // Predicated region
    $region2: #{tpu_custom_call.1} parent=1 // pred_check
      _
    $region3: #{tpu_custom_call.1} parent=1 // pred_check_branch
      %16 = sbr.rel (0) target = $region5
    $region4: #{tpu_custom_call.1} parent=1 // pred_region
      %s18 = ssub.s32 1024, 1024
      %19 = vsyncadd [#allocation4], %s18
      %s20 = sshll.u32 [#allocation3], 4
      %s21 = int_to_ptr.vmem [resolvable:$true] %s20
      %26 = dma.hbm_to_vmem [thread:$0]  %s0, 1024, %s21, [#allocation4], 512, 512, 32
    $region5: #{tpu_custom_call.1} parent=1 // pred_fallthru
      _
    // Predicated region
    $region6: #{tpu_custom_call.1} parent=1 // pred_check
      _
    $region7: #{tpu_custom_call.1} parent=1 // pred_check_branch
      %28 = sbr.rel (0) target = $region9
    $region8: #{tpu_custom_call.1} parent=1 // pred_region
      %s30 = ssub.s32 32768, 32768
      %31 = vsyncadd [#allocation6], %s30
      %s32 = sshll.u32 [#allocation5], 4
      %s33 = int_to_ptr.vmem [resolvable:$true] %s32
      %38 = dma.hbm_to_vmem [thread:$0]  %s1, 32768, %s33, [#allocation6], 256, 256, 16
    $region9: #{tpu_custom_call.1} parent=1 // pred_fallthru
      _
    // Predicated region
    $region10: #{tpu_custom_call.1} parent=1 // pred_check
      _
    $region11: #{tpu_custom_call.1} parent=1 // pred_check_branch
      %40 = sbr.rel (0) target = $region13
    $region12: #{tpu_custom_call.1} parent=1 // pred_region
      _
    $region13: #{tpu_custom_call.1} parent=1 // pred_fallthru
      _
    // Predicated region
    $region14: #{tpu_custom_call.1} parent=1 // pred_check
      _
    $region15: #{tpu_custom_call.1} parent=1 // pred_check_branch
      %42 = sbr.rel (0) target = $region17
    $region16: #{tpu_custom_call.1} parent=1 // pred_region
      %s44 = ssub.s32 8192, 8192
      %45 = vsyncadd [#allocation6], %s44
      %s46 = sshll.u32 [#allocation7], 4
      %s47 = int_to_ptr.vmem [resolvable:$true] %s46
      %52 = dma.hbm_to_vmem [thread:$0]  %s3, 8192, %s47, [#allocation6], 128, 128, 8
    $region17: #{tpu_custom_call.1} parent=1 // pred_fallthru
      _
    // Predicated region
    $region18: #{tpu_custom_call.1} parent=1 // pred_check
      _
    $region19: #{tpu_custom_call.1} parent=1 // pred_check_branch
      %54 = sbr.rel (0) target = $region21
    $region20: #{tpu_custom_call.1} parent=1 // pred_region
      _
    $region21: #{tpu_custom_call.1} parent=1 // pred_fallthru
      _
    // Predicated region
    $region22: #{tpu_custom_call.1} parent=1 // pred_check
      _
    $region23: #{tpu_custom_call.1} parent=1 // pred_check_branch
      %56 = sbr.rel (0) target = $region25
    $region24: #{tpu_custom_call.1} parent=1 // pred_region
      _
    $region25: #{tpu_custom_call.1} parent=1 // pred_fallthru
      _
    // Predicated region
    $region26: #{tpu_custom_call.1} parent=1 // pred_check
      _
    $region27: #{tpu_custom_call.1} parent=1 // pred_check_branch
      %58 = sbr.rel (0) target = $region29
    $region28: #{tpu_custom_call.1} parent=1 // pred_region
      _
    $region29: #{tpu_custom_call.1} parent=1 // pred_fallthru
      _
    // Predicated region
    $region30: #{tpu_custom_call.1} parent=1 // pred_check
      _
    $region31: #{tpu_custom_call.1} parent=1 // pred_check_branch
      %60 = sbr.rel (0) target = $region33
    $region32: #{tpu_custom_call.1} parent=1 // pred_region
      %61 = dma.done [#allocation4], 1024
    $region33: #{tpu_custom_call.1} parent=1 // pred_fallthru
      _
    // Predicated region
    $region34: #{tpu_custom_call.1} parent=1 // pred_check
      _
    $region35: #{tpu_custom_call.1} parent=1 // pred_check_branch
      %63 = sbr.rel (0) target = $region37
    $region36: #{tpu_custom_call.1} parent=1 // pred_region
      %64 = dma.done [#allocation6], 32768
    $region37: #{tpu_custom_call.1} parent=1 // pred_fallthru
      _
    // Predicated region
    $region38: #{tpu_custom_call.1} parent=1 // pred_check
      _
    $region39: #{tpu_custom_call.1} parent=1 // pred_check_branch
      %66 = sbr.rel (0) target = $region41
    $region40: #{tpu_custom_call.1} parent=1 // pred_region
      %67 = dma.done [#allocation6], 8192
    $region41: #{tpu_custom_call.1} parent=1 // pred_fallthru
      _
    %v68 = vld [vmem:[#allocation3] sm:$0xff]
    %v69 = vld [vmem:[#allocation3 + $0x8] sm:$0xff]
    %v70 = vld [vmem:[#allocation3 + $0x10] sm:$0xff]
    %v71 = vld [vmem:[#allocation3 + $0x18] sm:$0xff]
    %v72 = vld [vmem:[#allocation3 + $0x20] sm:$0xff]
    %v73 = vld [vmem:[#allocation3 + $0x28] sm:$0xff]
    %v74 = vld [vmem:[#allocation3 + $0x30] sm:$0xff]
    %v75 = vld [vmem:[#allocation3 + $0x38] sm:$0xff]
    %v76 = vld [vmem:[#allocation5] sm:$0xff]
    %v77 = vld [vmem:[#allocation5 + $0x8] sm:$0xff]
    %v78 = vld [vmem:[#allocation5 + $0x10] sm:$0xff]
    %v79 = vld [vmem:[#allocation5 + $0x18] sm:$0xff]
    %v80 = vld [vmem:[#allocation5 + $0x20] sm:$0xff]
    %v81 = vld [vmem:[#allocation5 + $0x28] sm:$0xff]
    %v82 = vld [vmem:[#allocation5 + $0x30] sm:$0xff]
    %v83 = vld [vmem:[#allocation5 + $0x38] sm:$0xff]
    %v84 = vld [vmem:[#allocation5 + $0x40] sm:$0xff]
    %v85 = vld [vmem:[#allocation5 + $0x48] sm:$0xff]
    %v86 = vld [vmem:[#allocation5 + $0x50] sm:$0xff]
    %v87 = vld [vmem:[#allocation5 + $0x58] sm:$0xff]
    %v88 = vld [vmem:[#allocation5 + $0x60] sm:$0xff]
    %v89 = vld [vmem:[#allocation5 + $0x68] sm:$0xff]
    %v90 = vld [vmem:[#allocation5 + $0x70] sm:$0xff]
    %v91 = vld [vmem:[#allocation5 + $0x78] sm:$0xff]
    %v92 = vld [vmem:[#allocation5 + $0x80] sm:$0xff]
    %v93 = vld [vmem:[#allocation5 + $0x88] sm:$0xff]
    %v94 = vld [vmem:[#allocation5 + $0x90] sm:$0xff]
    %v95 = vld [vmem:[#allocation5 + $0x98] sm:$0xff]
    %v96 = vld [vmem:[#allocation5 + $0xa0] sm:$0xff]
    %v97 = vld [vmem:[#allocation5 + $0xa8] sm:$0xff]
    %v98 = vld [vmem:[#allocation5 + $0xb0] sm:$0xff]
    %v99 = vld [vmem:[#allocation5 + $0xb8] sm:$0xff]
    %v100 = vld [vmem:[#allocation5 + $0xc0] sm:$0xff]
    %v101 = vld [vmem:[#allocation5 + $0xc8] sm:$0xff]
    %v102 = vld [vmem:[#allocation5 + $0xd0] sm:$0xff]
    %v103 = vld [vmem:[#allocation5 + $0xd8] sm:$0xff]
    %v104 = vld [vmem:[#allocation5 + $0xe0] sm:$0xff]
    %v105 = vld [vmem:[#allocation5 + $0xe8] sm:$0xff]
    %v106 = vld [vmem:[#allocation5 + $0xf0] sm:$0xff]
    %v107 = vld [vmem:[#allocation5 + $0xf8] sm:$0xff]
    %v108 = vld [vmem:[#allocation5 + $0x100] sm:$0xff]
    %v109 = vld [vmem:[#allocation5 + $0x108] sm:$0xff]
    %v110 = vld [vmem:[#allocation5 + $0x110] sm:$0xff]
    %v111 = vld [vmem:[#allocation5 + $0x118] sm:$0xff]
    %v112 = vld [vmem:[#allocation5 + $0x120] sm:$0xff]
    %v113 = vld [vmem:[#allocation5 + $0x128] sm:$0xff]
    %v114 = vld [vmem:[#allocation5 + $0x130] sm:$0xff]
    %v115 = vld [vmem:[#allocation5 + $0x138] sm:$0xff]
    %v116 = vld [vmem:[#allocation5 + $0x140] sm:$0xff]
    %v117 = vld [vmem:[#allocation5 + $0x148] sm:$0xff]
    %v118 = vld [vmem:[#allocation5 + $0x150] sm:$0xff]
    %v119 = vld [vmem:[#allocation5 + $0x158] sm:$0xff]
    %v120 = vld [vmem:[#allocation5 + $0x160] sm:$0xff]
    %v121 = vld [vmem:[#allocation5 + $0x168] sm:$0xff]
    %v122 = vld [vmem:[#allocation5 + $0x170] sm:$0xff]
    %v123 = vld [vmem:[#allocation5 + $0x178] sm:$0xff]
    %v124 = vld [vmem:[#allocation5 + $0x180] sm:$0xff]
    %v125 = vld [vmem:[#allocation5 + $0x188] sm:$0xff]
    %v126 = vld [vmem:[#allocation5 + $0x190] sm:$0xff]
    %v127 = vld [vmem:[#allocation5 + $0x198] sm:$0xff]
    %v128 = vld [vmem:[#allocation5 + $0x1a0] sm:$0xff]
    %v129 = vld [vmem:[#allocation5 + $0x1a8] sm:$0xff]
    %v130 = vld [vmem:[#allocation5 + $0x1b0] sm:$0xff]
    %v131 = vld [vmem:[#allocation5 + $0x1b8] sm:$0xff]
    %v132 = vld [vmem:[#allocation5 + $0x1c0] sm:$0xff]
    %v133 = vld [vmem:[#allocation5 + $0x1c8] sm:$0xff]
    %v134 = vld [vmem:[#allocation5 + $0x1d0] sm:$0xff]
    %v135 = vld [vmem:[#allocation5 + $0x1d8] sm:$0xff]
    %v136 = vld [vmem:[#allocation5 + $0x1e0] sm:$0xff]
    %v137 = vld [vmem:[#allocation5 + $0x1e8] sm:$0xff]
    %v138 = vld [vmem:[#allocation5 + $0x1f0] sm:$0xff]
    %v139 = vld [vmem:[#allocation5 + $0x1f8] sm:$0xff]
    %v140 = vld [vmem:[#allocation5 + $0x200] sm:$0xff]
    %v141 = vld [vmem:[#allocation5 + $0x208] sm:$0xff]
    %v142 = vld [vmem:[#allocation5 + $0x210] sm:$0xff]
    %v143 = vld [vmem:[#allocation5 + $0x218] sm:$0xff]
    %v144 = vld [vmem:[#allocation5 + $0x220] sm:$0xff]
    %v145 = vld [vmem:[#allocation5 + $0x228] sm:$0xff]
    %v146 = vld [vmem:[#allocation5 + $0x230] sm:$0xff]
    %v147 = vld [vmem:[#allocation5 + $0x238] sm:$0xff]
    %v148 = vld [vmem:[#allocation5 + $0x240] sm:$0xff]
    %v149 = vld [vmem:[#allocation5 + $0x248] sm:$0xff]
    %v150 = vld [vmem:[#allocation5 + $0x250] sm:$0xff]
    %v151 = vld [vmem:[#allocation5 + $0x258] sm:$0xff]
    %v152 = vld [vmem:[#allocation5 + $0x260] sm:$0xff]
    %v153 = vld [vmem:[#allocation5 + $0x268] sm:$0xff]
    %v154 = vld [vmem:[#allocation5 + $0x270] sm:$0xff]
    %v155 = vld [vmem:[#allocation5 + $0x278] sm:$0xff]
    %v156 = vld [vmem:[#allocation5 + $0x280] sm:$0xff]
    %v157 = vld [vmem:[#allocation5 + $0x288] sm:$0xff]
    %v158 = vld [vmem:[#allocation5 + $0x290] sm:$0xff]
    %v159 = vld [vmem:[#allocation5 + $0x298] sm:$0xff]
    %v160 = vld [vmem:[#allocation5 + $0x2a0] sm:$0xff]
    %v161 = vld [vmem:[#allocation5 + $0x2a8] sm:$0xff]
    %v162 = vld [vmem:[#allocation5 + $0x2b0] sm:$0xff]
    %v163 = vld [vmem:[#allocation5 + $0x2b8] sm:$0xff]
    %v164 = vld [vmem:[#allocation5 + $0x2c0] sm:$0xff]
    %v165 = vld [vmem:[#allocation5 + $0x2c8] sm:$0xff]
    %v166 = vld [vmem:[#allocation5 + $0x2d0] sm:$0xff]
    %v167 = vld [vmem:[#allocation5 + $0x2d8] sm:$0xff]
    %v168 = vld [vmem:[#allocation5 + $0x2e0] sm:$0xff]
    %v169 = vld [vmem:[#allocation5 + $0x2e8] sm:$0xff]
    %v170 = vld [vmem:[#allocation5 + $0x2f0] sm:$0xff]
    %v171 = vld [vmem:[#allocation5 + $0x2f8] sm:$0xff]
    %v172 = vld [vmem:[#allocation5 + $0x300] sm:$0xff]
    %v173 = vld [vmem:[#allocation5 + $0x308] sm:$0xff]
    %v174 = vld [vmem:[#allocation5 + $0x310] sm:$0xff]
    %v175 = vld [vmem:[#allocation5 + $0x318] sm:$0xff]
    %v176 = vld [vmem:[#allocation5 + $0x320] sm:$0xff]
    %v177 = vld [vmem:[#allocation5 + $0x328] sm:$0xff]
    %v178 = vld [vmem:[#allocation5 + $0x330] sm:$0xff]
    %v179 = vld [vmem:[#allocation5 + $0x338] sm:$0xff]
    %v180 = vld [vmem:[#allocation5 + $0x340] sm:$0xff]
    %v181 = vld [vmem:[#allocation5 + $0x348] sm:$0xff]
    %v182 = vld [vmem:[#allocation5 + $0x350] sm:$0xff]
    %v183 = vld [vmem:[#allocation5 + $0x358] sm:$0xff]
    %v184 = vld [vmem:[#allocation5 + $0x360] sm:$0xff]
    %v185 = vld [vmem:[#allocation5 + $0x368] sm:$0xff]
    %v186 = vld [vmem:[#allocation5 + $0x370] sm:$0xff]
    %v187 = vld [vmem:[#allocation5 + $0x378] sm:$0xff]
    %v188 = vld [vmem:[#allocation5 + $0x380] sm:$0xff]
    %v189 = vld [vmem:[#allocation5 + $0x388] sm:$0xff]
    %v190 = vld [vmem:[#allocation5 + $0x390] sm:$0xff]
    %v191 = vld [vmem:[#allocation5 + $0x398] sm:$0xff]
    %v192 = vld [vmem:[#allocation5 + $0x3a0] sm:$0xff]
    %v193 = vld [vmem:[#allocation5 + $0x3a8] sm:$0xff]
    %v194 = vld [vmem:[#allocation5 + $0x3b0] sm:$0xff]
    %v195 = vld [vmem:[#allocation5 + $0x3b8] sm:$0xff]
    %v196 = vld [vmem:[#allocation5 + $0x3c0] sm:$0xff]
    %v197 = vld [vmem:[#allocation5 + $0x3c8] sm:$0xff]
    %v198 = vld [vmem:[#allocation5 + $0x3d0] sm:$0xff]
    %v199 = vld [vmem:[#allocation5 + $0x3d8] sm:$0xff]
    %v200 = vld [vmem:[#allocation5 + $0x3e0] sm:$0xff]
    %v201 = vld [vmem:[#allocation5 + $0x3e8] sm:$0xff]
    %v202 = vld [vmem:[#allocation5 + $0x3f0] sm:$0xff]
    %v203 = vld [vmem:[#allocation5 + $0x3f8] sm:$0xff]
    %v204 = vld [vmem:[#allocation5 + $0x400] sm:$0xff]
    %v205 = vld [vmem:[#allocation5 + $0x408] sm:$0xff]
    %v206 = vld [vmem:[#allocation5 + $0x410] sm:$0xff]
    %v207 = vld [vmem:[#allocation5 + $0x418] sm:$0xff]
    %v208 = vld [vmem:[#allocation5 + $0x420] sm:$0xff]
    %v209 = vld [vmem:[#allocation5 + $0x428] sm:$0xff]
    %v210 = vld [vmem:[#allocation5 + $0x430] sm:$0xff]
    %v211 = vld [vmem:[#allocation5 + $0x438] sm:$0xff]
    %v212 = vld [vmem:[#allocation5 + $0x440] sm:$0xff]
    %v213 = vld [vmem:[#allocation5 + $0x448] sm:$0xff]
    %v214 = vld [vmem:[#allocation5 + $0x450] sm:$0xff]
    %v215 = vld [vmem:[#allocation5 + $0x458] sm:$0xff]
    %v216 = vld [vmem:[#allocation5 + $0x460] sm:$0xff]
    %v217 = vld [vmem:[#allocation5 + $0x468] sm:$0xff]
    %v218 = vld [vmem:[#allocation5 + $0x470] sm:$0xff]
    %v219 = vld [vmem:[#allocation5 + $0x478] sm:$0xff]
    %v220 = vld [vmem:[#allocation5 + $0x480] sm:$0xff]
    %v221 = vld [vmem:[#allocation5 + $0x488] sm:$0xff]
    %v222 = vld [vmem:[#allocation5 + $0x490] sm:$0xff]
    %v223 = vld [vmem:[#allocation5 + $0x498] sm:$0xff]
    %v224 = vld [vmem:[#allocation5 + $0x4a0] sm:$0xff]
    %v225 = vld [vmem:[#allocation5 + $0x4a8] sm:$0xff]
    %v226 = vld [vmem:[#allocation5 + $0x4b0] sm:$0xff]
    %v227 = vld [vmem:[#allocation5 + $0x4b8] sm:$0xff]
    %v228 = vld [vmem:[#allocation5 + $0x4c0] sm:$0xff]
    %v229 = vld [vmem:[#allocation5 + $0x4c8] sm:$0xff]
    %v230 = vld [vmem:[#allocation5 + $0x4d0] sm:$0xff]
    %v231 = vld [vmem:[#allocation5 + $0x4d8] sm:$0xff]
    %v232 = vld [vmem:[#allocation5 + $0x4e0] sm:$0xff]
    %v233 = vld [vmem:[#allocation5 + $0x4e8] sm:$0xff]
    %v234 = vld [vmem:[#allocation5 + $0x4f0] sm:$0xff]
    %v235 = vld [vmem:[#allocation5 + $0x4f8] sm:$0xff]
    %v236 = vld [vmem:[#allocation5 + $0x500] sm:$0xff]
    %v237 = vld [vmem:[#allocation5 + $0x508] sm:$0xff]
    %v238 = vld [vmem:[#allocation5 + $0x510] sm:$0xff]
    %v239 = vld [vmem:[#allocation5 + $0x518] sm:$0xff]
    %v240 = vld [vmem:[#allocation5 + $0x520] sm:$0xff]
    %v241 = vld [vmem:[#allocation5 + $0x528] sm:$0xff]
    %v242 = vld [vmem:[#allocation5 + $0x530] sm:$0xff]
    %v243 = vld [vmem:[#allocation5 + $0x538] sm:$0xff]
    %v244 = vld [vmem:[#allocation5 + $0x540] sm:$0xff]
    %v245 = vld [vmem:[#allocation5 + $0x548] sm:$0xff]
    %v246 = vld [vmem:[#allocation5 + $0x550] sm:$0xff]
    %v247 = vld [vmem:[#allocation5 + $0x558] sm:$0xff]
    %v248 = vld [vmem:[#allocation5 + $0x560] sm:$0xff]
    %v249 = vld [vmem:[#allocation5 + $0x568] sm:$0xff]
    %v250 = vld [vmem:[#allocation5 + $0x570] sm:$0xff]
    %v251 = vld [vmem:[#allocation5 + $0x578] sm:$0xff]
    %v252 = vld [vmem:[#allocation5 + $0x580] sm:$0xff]
    %v253 = vld [vmem:[#allocation5 + $0x588] sm:$0xff]
    %v254 = vld [vmem:[#allocation5 + $0x590] sm:$0xff]
    %v255 = vld [vmem:[#allocation5 + $0x598] sm:$0xff]
    %v256 = vld [vmem:[#allocation5 + $0x5a0] sm:$0xff]
    %v257 = vld [vmem:[#allocation5 + $0x5a8] sm:$0xff]
    %v258 = vld [vmem:[#allocation5 + $0x5b0] sm:$0xff]
    %v259 = vld [vmem:[#allocation5 + $0x5b8] sm:$0xff]
    %v260 = vld [vmem:[#allocation5 + $0x5c0] sm:$0xff]
    %v261 = vld [vmem:[#allocation5 + $0x5c8] sm:$0xff]
    %v262 = vld [vmem:[#allocation5 + $0x5d0] sm:$0xff]
    %v263 = vld [vmem:[#allocation5 + $0x5d8] sm:$0xff]
    %v264 = vld [vmem:[#allocation5 + $0x5e0] sm:$0xff]
    %v265 = vld [vmem:[#allocation5 + $0x5e8] sm:$0xff]
    %v266 = vld [vmem:[#allocation5 + $0x5f0] sm:$0xff]
    %v267 = vld [vmem:[#allocation5 + $0x5f8] sm:$0xff]
    %v268 = vld [vmem:[#allocation5 + $0x600] sm:$0xff]
    %v269 = vld [vmem:[#allocation5 + $0x608] sm:$0xff]
    %v270 = vld [vmem:[#allocation5 + $0x610] sm:$0xff]
    %v271 = vld [vmem:[#allocation5 + $0x618] sm:$0xff]
    %v272 = vld [vmem:[#allocation5 + $0x620] sm:$0xff]
    %v273 = vld [vmem:[#allocation5 + $0x628] sm:$0xff]
    %v274 = vld [vmem:[#allocation5 + $0x630] sm:$0xff]
    %v275 = vld [vmem:[#allocation5 + $0x638] sm:$0xff]
    %v276 = vld [vmem:[#allocation5 + $0x640] sm:$0xff]
    %v277 = vld [vmem:[#allocation5 + $0x648] sm:$0xff]
    %v278 = vld [vmem:[#allocation5 + $0x650] sm:$0xff]
    %v279 = vld [vmem:[#allocation5 + $0x658] sm:$0xff]
    %v280 = vld [vmem:[#allocation5 + $0x660] sm:$0xff]
    %v281 = vld [vmem:[#allocation5 + $0x668] sm:$0xff]
    %v282 = vld [vmem:[#allocation5 + $0x670] sm:$0xff]
    %v283 = vld [vmem:[#allocation5 + $0x678] sm:$0xff]
    %v284 = vld [vmem:[#allocation5 + $0x680] sm:$0xff]
    %v285 = vld [vmem:[#allocation5 + $0x688] sm:$0xff]
    %v286 = vld [vmem:[#allocation5 + $0x690] sm:$0xff]
    %v287 = vld [vmem:[#allocation5 + $0x698] sm:$0xff]
    %v288 = vld [vmem:[#allocation5 + $0x6a0] sm:$0xff]
    %v289 = vld [vmem:[#allocation5 + $0x6a8] sm:$0xff]
    %v290 = vld [vmem:[#allocation5 + $0x6b0] sm:$0xff]
    %v291 = vld [vmem:[#allocation5 + $0x6b8] sm:$0xff]
    %v292 = vld [vmem:[#allocation5 + $0x6c0] sm:$0xff]
    %v293 = vld [vmem:[#allocation5 + $0x6c8] sm:$0xff]
    %v294 = vld [vmem:[#allocation5 + $0x6d0] sm:$0xff]
    %v295 = vld [vmem:[#allocation5 + $0x6d8] sm:$0xff]
    %v296 = vld [vmem:[#allocation5 + $0x6e0] sm:$0xff]
    %v297 = vld [vmem:[#allocation5 + $0x6e8] sm:$0xff]
    %v298 = vld [vmem:[#allocation5 + $0x6f0] sm:$0xff]
    %v299 = vld [vmem:[#allocation5 + $0x6f8] sm:$0xff]
    %v300 = vld [vmem:[#allocation5 + $0x700] sm:$0xff]
    %v301 = vld [vmem:[#allocation5 + $0x708] sm:$0xff]
    %v302 = vld [vmem:[#allocation5 + $0x710] sm:$0xff]
    %v303 = vld [vmem:[#allocation5 + $0x718] sm:$0xff]
    %v304 = vld [vmem:[#allocation5 + $0x720] sm:$0xff]
    %v305 = vld [vmem:[#allocation5 + $0x728] sm:$0xff]
    %v306 = vld [vmem:[#allocation5 + $0x730] sm:$0xff]
    %v307 = vld [vmem:[#allocation5 + $0x738] sm:$0xff]
    %v308 = vld [vmem:[#allocation5 + $0x740] sm:$0xff]
    %v309 = vld [vmem:[#allocation5 + $0x748] sm:$0xff]
    %v310 = vld [vmem:[#allocation5 + $0x750] sm:$0xff]
    %v311 = vld [vmem:[#allocation5 + $0x758] sm:$0xff]
    %v312 = vld [vmem:[#allocation5 + $0x760] sm:$0xff]
    %v313 = vld [vmem:[#allocation5 + $0x768] sm:$0xff]
    %v314 = vld [vmem:[#allocation5 + $0x770] sm:$0xff]
    %v315 = vld [vmem:[#allocation5 + $0x778] sm:$0xff]
    %v316 = vld [vmem:[#allocation5 + $0x780] sm:$0xff]
    %v317 = vld [vmem:[#allocation5 + $0x788] sm:$0xff]
    %v318 = vld [vmem:[#allocation5 + $0x790] sm:$0xff]
    %v319 = vld [vmem:[#allocation5 + $0x798] sm:$0xff]
    %v320 = vld [vmem:[#allocation5 + $0x7a0] sm:$0xff]
    %v321 = vld [vmem:[#allocation5 + $0x7a8] sm:$0xff]
    %v322 = vld [vmem:[#allocation5 + $0x7b0] sm:$0xff]
    %v323 = vld [vmem:[#allocation5 + $0x7b8] sm:$0xff]
    %v324 = vld [vmem:[#allocation5 + $0x7c0] sm:$0xff]
    %v325 = vld [vmem:[#allocation5 + $0x7c8] sm:$0xff]
    %v326 = vld [vmem:[#allocation5 + $0x7d0] sm:$0xff]
    %v327 = vld [vmem:[#allocation5 + $0x7d8] sm:$0xff]
    %v328 = vld [vmem:[#allocation5 + $0x7e0] sm:$0xff]
    %v329 = vld [vmem:[#allocation5 + $0x7e8] sm:$0xff]
    %v330 = vld [vmem:[#allocation5 + $0x7f0] sm:$0xff]
    %v331 = vld [vmem:[#allocation5 + $0x7f8] sm:$0xff]
    %v332 = vld [vmem:[%s2] sm:$0xf]
    %v334 = vlaneseq
    %v335 = vshrl.u32 %v334, 7
    %v336 = vsub.s32 0, %v335
    %v337 = vrot.slane %v332, %v336
    %v338 = vlaneseq
    %v339 = vshrl.u32 %v338, 7
    %v340 = vsub.s32 1, %v339
    %v341 = vrot.slane %v332, %v340
    %v342 = vlaneseq
    %v343 = vshrl.u32 %v342, 7
    %v344 = vsub.s32 2, %v343
    %v345 = vrot.slane %v332, %v344
    %v346 = vlaneseq
    %v347 = vshrl.u32 %v346, 7
    %v348 = vsub.s32 3, %v347
    %v349 = vrot.slane %v332, %v348
    %v362 = vunpack.c.l.b16 %v68
    %v363 = vunpack.c.h.b16 %v68
    %v364 = vunpack.c.l.b16 %v69
    %v365 = vunpack.c.h.b16 %v69
    %v366 = vunpack.c.l.b16 %v70
    %v367 = vunpack.c.h.b16 %v70
    %v368 = vunpack.c.l.b16 %v71
    %v369 = vunpack.c.h.b16 %v71
    %v370 = vunpack.c.l.b16 %v72
    %v371 = vunpack.c.h.b16 %v72
    %v372 = vunpack.c.l.b16 %v73
    %v373 = vunpack.c.h.b16 %v73
    %v374 = vunpack.c.l.b16 %v74
    %v375 = vunpack.c.h.b16 %v74
    %v376 = vunpack.c.l.b16 %v75
    %v377 = vunpack.c.h.b16 %v75
    %v378 = vpack.c.b16 %v370, %v362
    %v379 = vpack.c.b16 %v371, %v363
    %v380 = vpack.c.b16 %v372, %v364
    %v381 = vpack.c.b16 %v373, %v365
    %v382 = vpack.c.b16 %v374, %v366
    %v383 = vpack.c.b16 %v375, %v367
    %v384 = vpack.c.b16 %v376, %v368
    %v385 = vpack.c.b16 %v377, %v369
    %v650 = vunpack.c.l.b16 %v76
    %v651 = vunpack.c.h.b16 %v76
    %v652 = vunpack.c.l.b16 %v77
    %v653 = vunpack.c.h.b16 %v77
    %v654 = vunpack.c.l.b16 %v78
    %v655 = vunpack.c.h.b16 %v78
    %v656 = vunpack.c.l.b16 %v79
    %v657 = vunpack.c.h.b16 %v79
    %v658 = vunpack.c.l.b16 %v80
    %v659 = vunpack.c.h.b16 %v80
    %v660 = vunpack.c.l.b16 %v81
    %v661 = vunpack.c.h.b16 %v81
    %v662 = vunpack.c.l.b16 %v82
    %v663 = vunpack.c.h.b16 %v82
    %v664 = vunpack.c.l.b16 %v83
    %v665 = vunpack.c.h.b16 %v83
    %v666 = vunpack.c.l.b16 %v84
    %v667 = vunpack.c.h.b16 %v84
    %v668 = vunpack.c.l.b16 %v85
    %v669 = vunpack.c.h.b16 %v85
    %v670 = vunpack.c.l.b16 %v86
    %v671 = vunpack.c.h.b16 %v86
    %v672 = vunpack.c.l.b16 %v87
    %v673 = vunpack.c.h.b16 %v87
    %v674 = vunpack.c.l.b16 %v88
    %v675 = vunpack.c.h.b16 %v88
    %v676 = vunpack.c.l.b16 %v89
    %v677 = vunpack.c.h.b16 %v89
    %v678 = vunpack.c.l.b16 %v90
    %v679 = vunpack.c.h.b16 %v90
    %v680 = vunpack.c.l.b16 %v91
    %v681 = vunpack.c.h.b16 %v91
    %v682 = vunpack.c.l.b16 %v92
    %v683 = vunpack.c.h.b16 %v92
    %v684 = vunpack.c.l.b16 %v93
    %v685 = vunpack.c.h.b16 %v93
    %v686 = vunpack.c.l.b16 %v94
    %v687 = vunpack.c.h.b16 %v94
    %v688 = vunpack.c.l.b16 %v95
    %v689 = vunpack.c.h.b16 %v95
    %v690 = vunpack.c.l.b16 %v96
    %v691 = vunpack.c.h.b16 %v96
    %v692 = vunpack.c.l.b16 %v97
    %v693 = vunpack.c.h.b16 %v97
    %v694 = vunpack.c.l.b16 %v98
    %v695 = vunpack.c.h.b16 %v98
    %v696 = vunpack.c.l.b16 %v99
    %v697 = vunpack.c.h.b16 %v99
    %v698 = vunpack.c.l.b16 %v100
    %v699 = vunpack.c.h.b16 %v100
    %v700 = vunpack.c.l.b16 %v101
    %v701 = vunpack.c.h.b16 %v101
    %v702 = vunpack.c.l.b16 %v102
    %v703 = vunpack.c.h.b16 %v102
    %v704 = vunpack.c.l.b16 %v103
    %v705 = vunpack.c.h.b16 %v103
    %v706 = vunpack.c.l.b16 %v104
    %v707 = vunpack.c.h.b16 %v104
    %v708 = vunpack.c.l.b16 %v105
    %v709 = vunpack.c.h.b16 %v105
    %v710 = vunpack.c.l.b16 %v106
    %v711 = vunpack.c.h.b16 %v106
    %v712 = vunpack.c.l.b16 %v107
    %v713 = vunpack.c.h.b16 %v107
    %v714 = vunpack.c.l.b16 %v108
    %v715 = vunpack.c.h.b16 %v108
    %v716 = vunpack.c.l.b16 %v109
    %v717 = vunpack.c.h.b16 %v109
    %v718 = vunpack.c.l.b16 %v110
    %v719 = vunpack.c.h.b16 %v110
    %v720 = vunpack.c.l.b16 %v111
    %v721 = vunpack.c.h.b16 %v111
    %v722 = vunpack.c.l.b16 %v112
    %v723 = vunpack.c.h.b16 %v112
    %v724 = vunpack.c.l.b16 %v113
    %v725 = vunpack.c.h.b16 %v113
    %v726 = vunpack.c.l.b16 %v114
    %v727 = vunpack.c.h.b16 %v114
    %v728 = vunpack.c.l.b16 %v115
    %v729 = vunpack.c.h.b16 %v115
    %v730 = vunpack.c.l.b16 %v116
    %v731 = vunpack.c.h.b16 %v116
    %v732 = vunpack.c.l.b16 %v117
    %v733 = vunpack.c.h.b16 %v117
    %v734 = vunpack.c.l.b16 %v118
    %v735 = vunpack.c.h.b16 %v118
    %v736 = vunpack.c.l.b16 %v119
    %v737 = vunpack.c.h.b16 %v119
    %v738 = vunpack.c.l.b16 %v120
    %v739 = vunpack.c.h.b16 %v120
    %v740 = vunpack.c.l.b16 %v121
    %v741 = vunpack.c.h.b16 %v121
    %v742 = vunpack.c.l.b16 %v122
    %v743 = vunpack.c.h.b16 %v122
    %v744 = vunpack.c.l.b16 %v123
    %v745 = vunpack.c.h.b16 %v123
    %v746 = vunpack.c.l.b16 %v124
    %v747 = vunpack.c.h.b16 %v124
    %v748 = vunpack.c.l.b16 %v125
    %v749 = vunpack.c.h.b16 %v125
    %v750 = vunpack.c.l.b16 %v126
    %v751 = vunpack.c.h.b16 %v126
    %v752 = vunpack.c.l.b16 %v127
    %v753 = vunpack.c.h.b16 %v127
    %v754 = vunpack.c.l.b16 %v128
    %v755 = vunpack.c.h.b16 %v128
    %v756 = vunpack.c.l.b16 %v129
    %v757 = vunpack.c.h.b16 %v129
    %v758 = vunpack.c.l.b16 %v130
    %v759 = vunpack.c.h.b16 %v130
    %v760 = vunpack.c.l.b16 %v131
    %v761 = vunpack.c.h.b16 %v131
    %v762 = vunpack.c.l.b16 %v132
    %v763 = vunpack.c.h.b16 %v132
    %v764 = vunpack.c.l.b16 %v133
    %v765 = vunpack.c.h.b16 %v133
    %v766 = vunpack.c.l.b16 %v134
    %v767 = vunpack.c.h.b16 %v134
    %v768 = vunpack.c.l.b16 %v135
    %v769 = vunpack.c.h.b16 %v135
    %v770 = vunpack.c.l.b16 %v136
    %v771 = vunpack.c.h.b16 %v136
    %v772 = vunpack.c.l.b16 %v137
    %v773 = vunpack.c.h.b16 %v137
    %v774 = vunpack.c.l.b16 %v138
    %v775 = vunpack.c.h.b16 %v138
    %v776 = vunpack.c.l.b16 %v139
    %v777 = vunpack.c.h.b16 %v139
    %v778 = vunpack.c.l.b16 %v140
    %v779 = vunpack.c.h.b16 %v140
    %v780 = vunpack.c.l.b16 %v141
    %v781 = vunpack.c.h.b16 %v141
    %v782 = vunpack.c.l.b16 %v142
    %v783 = vunpack.c.h.b16 %v142
    %v784 = vunpack.c.l.b16 %v143
    %v785 = vunpack.c.h.b16 %v143
    %v786 = vunpack.c.l.b16 %v144
    %v787 = vunpack.c.h.b16 %v144
    %v788 = vunpack.c.l.b16 %v145
    %v789 = vunpack.c.h.b16 %v145
    %v790 = vunpack.c.l.b16 %v146
    %v791 = vunpack.c.h.b16 %v146
    %v792 = vunpack.c.l.b16 %v147
    %v793 = vunpack.c.h.b16 %v147
    %v794 = vunpack.c.l.b16 %v148
    %v795 = vunpack.c.h.b16 %v148
    %v796 = vunpack.c.l.b16 %v149
    %v797 = vunpack.c.h.b16 %v149
    %v798 = vunpack.c.l.b16 %v150
    %v799 = vunpack.c.h.b16 %v150
    %v800 = vunpack.c.l.b16 %v151
    %v801 = vunpack.c.h.b16 %v151
    %v802 = vunpack.c.l.b16 %v152
    %v803 = vunpack.c.h.b16 %v152
    %v804 = vunpack.c.l.b16 %v153
    %v805 = vunpack.c.h.b16 %v153
    %v806 = vunpack.c.l.b16 %v154
    %v807 = vunpack.c.h.b16 %v154
    %v808 = vunpack.c.l.b16 %v155
    %v809 = vunpack.c.h.b16 %v155
    %v810 = vunpack.c.l.b16 %v156
    %v811 = vunpack.c.h.b16 %v156
    %v812 = vunpack.c.l.b16 %v157
    %v813 = vunpack.c.h.b16 %v157
    %v814 = vunpack.c.l.b16 %v158
    %v815 = vunpack.c.h.b16 %v158
    %v816 = vunpack.c.l.b16 %v159
    %v817 = vunpack.c.h.b16 %v159
    %v818 = vunpack.c.l.b16 %v160
    %v819 = vunpack.c.h.b16 %v160
    %v820 = vunpack.c.l.b16 %v161
    %v821 = vunpack.c.h.b16 %v161
    %v822 = vunpack.c.l.b16 %v162
    %v823 = vunpack.c.h.b16 %v162
    %v824 = vunpack.c.l.b16 %v163
    %v825 = vunpack.c.h.b16 %v163
    %v826 = vunpack.c.l.b16 %v164
    %v827 = vunpack.c.h.b16 %v164
    %v828 = vunpack.c.l.b16 %v165
    %v829 = vunpack.c.h.b16 %v165
    %v830 = vunpack.c.l.b16 %v166
    %v831 = vunpack.c.h.b16 %v166
    %v832 = vunpack.c.l.b16 %v167
    %v833 = vunpack.c.h.b16 %v167
    %v834 = vunpack.c.l.b16 %v168
    %v835 = vunpack.c.h.b16 %v168
    %v836 = vunpack.c.l.b16 %v169
    %v837 = vunpack.c.h.b16 %v169
    %v838 = vunpack.c.l.b16 %v170
    %v839 = vunpack.c.h.b16 %v170
    %v840 = vunpack.c.l.b16 %v171
    %v841 = vunpack.c.h.b16 %v171
    %v842 = vunpack.c.l.b16 %v172
    %v843 = vunpack.c.h.b16 %v172
    %v844 = vunpack.c.l.b16 %v173
    %v845 = vunpack.c.h.b16 %v173
    %v846 = vunpack.c.l.b16 %v174
    %v847 = vunpack.c.h.b16 %v174
    %v848 = vunpack.c.l.b16 %v175
    %v849 = vunpack.c.h.b16 %v175
    %v850 = vunpack.c.l.b16 %v176
    %v851 = vunpack.c.h.b16 %v176
    %v852 = vunpack.c.l.b16 %v177
    %v853 = vunpack.c.h.b16 %v177
    %v854 = vunpack.c.l.b16 %v178
    %v855 = vunpack.c.h.b16 %v178
    %v856 = vunpack.c.l.b16 %v179
    %v857 = vunpack.c.h.b16 %v179
    %v858 = vunpack.c.l.b16 %v180
    %v859 = vunpack.c.h.b16 %v180
    %v860 = vunpack.c.l.b16 %v181
    %v861 = vunpack.c.h.b16 %v181
    %v862 = vunpack.c.l.b16 %v182
    %v863 = vunpack.c.h.b16 %v182
    %v864 = vunpack.c.l.b16 %v183
    %v865 = vunpack.c.h.b16 %v183
    %v866 = vunpack.c.l.b16 %v184
    %v867 = vunpack.c.h.b16 %v184
    %v868 = vunpack.c.l.b16 %v185
    %v869 = vunpack.c.h.b16 %v185
    %v870 = vunpack.c.l.b16 %v186
    %v871 = vunpack.c.h.b16 %v186
    %v872 = vunpack.c.l.b16 %v187
    %v873 = vunpack.c.h.b16 %v187
    %v874 = vunpack.c.l.b16 %v188
    %v875 = vunpack.c.h.b16 %v188
    %v876 = vunpack.c.l.b16 %v189
    %v877 = vunpack.c.h.b16 %v189
    %v878 = vunpack.c.l.b16 %v190
    %v879 = vunpack.c.h.b16 %v190
    %v880 = vunpack.c.l.b16 %v191
    %v881 = vunpack.c.h.b16 %v191
    %v882 = vunpack.c.l.b16 %v192
    %v883 = vunpack.c.h.b16 %v192
    %v884 = vunpack.c.l.b16 %v193
    %v885 = vunpack.c.h.b16 %v193
    %v886 = vunpack.c.l.b16 %v194
    %v887 = vunpack.c.h.b16 %v194
    %v888 = vunpack.c.l.b16 %v195
    %v889 = vunpack.c.h.b16 %v195
    %v890 = vunpack.c.l.b16 %v196
    %v891 = vunpack.c.h.b16 %v196
    %v892 = vunpack.c.l.b16 %v197
    %v893 = vunpack.c.h.b16 %v197
    %v894 = vunpack.c.l.b16 %v198
    %v895 = vunpack.c.h.b16 %v198
    %v896 = vunpack.c.l.b16 %v199
    %v897 = vunpack.c.h.b16 %v199
    %v898 = vunpack.c.l.b16 %v200
    %v899 = vunpack.c.h.b16 %v200
    %v900 = vunpack.c.l.b16 %v201
    %v901 = vunpack.c.h.b16 %v201
    %v902 = vunpack.c.l.b16 %v202
    %v903 = vunpack.c.h.b16 %v202
    %v904 = vunpack.c.l.b16 %v203
    %v905 = vunpack.c.h.b16 %v203
    %v906 = vunpack.c.l.b16 %v204
    %v907 = vunpack.c.h.b16 %v204
    %v908 = vunpack.c.l.b16 %v205
    %v909 = vunpack.c.h.b16 %v205
    %v910 = vunpack.c.l.b16 %v206
    %v911 = vunpack.c.h.b16 %v206
    %v912 = vunpack.c.l.b16 %v207
    %v913 = vunpack.c.h.b16 %v207
    %v914 = vunpack.c.l.b16 %v208
    %v915 = vunpack.c.h.b16 %v208
    %v916 = vunpack.c.l.b16 %v209
    %v917 = vunpack.c.h.b16 %v209
    %v918 = vunpack.c.l.b16 %v210
    %v919 = vunpack.c.h.b16 %v210
    %v920 = vunpack.c.l.b16 %v211
    %v921 = vunpack.c.h.b16 %v211
    %v922 = vunpack.c.l.b16 %v212
    %v923 = vunpack.c.h.b16 %v212
    %v924 = vunpack.c.l.b16 %v213
    %v925 = vunpack.c.h.b16 %v213
    %v926 = vunpack.c.l.b16 %v214
    %v927 = vunpack.c.h.b16 %v214
    %v928 = vunpack.c.l.b16 %v215
    %v929 = vunpack.c.h.b16 %v215
    %v930 = vunpack.c.l.b16 %v216
    %v931 = vunpack.c.h.b16 %v216
    %v932 = vunpack.c.l.b16 %v217
    %v933 = vunpack.c.h.b16 %v217
    %v934 = vunpack.c.l.b16 %v218
    %v935 = vunpack.c.h.b16 %v218
    %v936 = vunpack.c.l.b16 %v219
    %v937 = vunpack.c.h.b16 %v219
    %v938 = vunpack.c.l.b16 %v220
    %v939 = vunpack.c.h.b16 %v220
    %v940 = vunpack.c.l.b16 %v221
    %v941 = vunpack.c.h.b16 %v221
    %v942 = vunpack.c.l.b16 %v222
    %v943 = vunpack.c.h.b16 %v222
    %v944 = vunpack.c.l.b16 %v223
    %v945 = vunpack.c.h.b16 %v223
    %v946 = vunpack.c.l.b16 %v224
    %v947 = vunpack.c.h.b16 %v224
    %v948 = vunpack.c.l.b16 %v225
    %v949 = vunpack.c.h.b16 %v225
    %v950 = vunpack.c.l.b16 %v226
    %v951 = vunpack.c.h.b16 %v226
    %v952 = vunpack.c.l.b16 %v227
    %v953 = vunpack.c.h.b16 %v227
    %v954 = vunpack.c.l.b16 %v228
    %v955 = vunpack.c.h.b16 %v228
    %v956 = vunpack.c.l.b16 %v229
    %v957 = vunpack.c.h.b16 %v229
    %v958 = vunpack.c.l.b16 %v230
    %v959 = vunpack.c.h.b16 %v230
    %v960 = vunpack.c.l.b16 %v231
    %v961 = vunpack.c.h.b16 %v231
    %v962 = vunpack.c.l.b16 %v232
    %v963 = vunpack.c.h.b16 %v232
    %v964 = vunpack.c.l.b16 %v233
    %v965 = vunpack.c.h.b16 %v233
    %v966 = vunpack.c.l.b16 %v234
    %v967 = vunpack.c.h.b16 %v234
    %v968 = vunpack.c.l.b16 %v235
    %v969 = vunpack.c.h.b16 %v235
    %v970 = vunpack.c.l.b16 %v236
    %v971 = vunpack.c.h.b16 %v236
    %v972 = vunpack.c.l.b16 %v237
    %v973 = vunpack.c.h.b16 %v237
    %v974 = vunpack.c.l.b16 %v238
    %v975 = vunpack.c.h.b16 %v238
    %v976 = vunpack.c.l.b16 %v239
    %v977 = vunpack.c.h.b16 %v239
    %v978 = vunpack.c.l.b16 %v240
    %v979 = vunpack.c.h.b16 %v240
    %v980 = vunpack.c.l.b16 %v241
    %v981 = vunpack.c.h.b16 %v241
    %v982 = vunpack.c.l.b16 %v242
    %v983 = vunpack.c.h.b16 %v242
    %v984 = vunpack.c.l.b16 %v243
    %v985 = vunpack.c.h.b16 %v243
    %v986 = vunpack.c.l.b16 %v244
    %v987 = vunpack.c.h.b16 %v244
    %v988 = vunpack.c.l.b16 %v245
    %v989 = vunpack.c.h.b16 %v245
    %v990 = vunpack.c.l.b16 %v246
    %v991 = vunpack.c.h.b16 %v246
    %v992 = vunpack.c.l.b16 %v247
    %v993 = vunpack.c.h.b16 %v247
    %v994 = vunpack.c.l.b16 %v248
    %v995 = vunpack.c.h.b16 %v248
    %v996 = vunpack.c.l.b16 %v249
    %v997 = vunpack.c.h.b16 %v249
    %v998 = vunpack.c.l.b16 %v250
    %v999 = vunpack.c.h.b16 %v250
    %v1000 = vunpack.c.l.b16 %v251
    %v1001 = vunpack.c.h.b16 %v251
    %v1002 = vunpack.c.l.b16 %v252
    %v1003 = vunpack.c.h.b16 %v252
    %v1004 = vunpack.c.l.b16 %v253
    %v1005 = vunpack.c.h.b16 %v253
    %v1006 = vunpack.c.l.b16 %v254
    %v1007 = vunpack.c.h.b16 %v254
    %v1008 = vunpack.c.l.b16 %v255
    %v1009 = vunpack.c.h.b16 %v255
    %v1010 = vunpack.c.l.b16 %v256
    %v1011 = vunpack.c.h.b16 %v256
    %v1012 = vunpack.c.l.b16 %v257
    %v1013 = vunpack.c.h.b16 %v257
    %v1014 = vunpack.c.l.b16 %v258
    %v1015 = vunpack.c.h.b16 %v258
    %v1016 = vunpack.c.l.b16 %v259
    %v1017 = vunpack.c.h.b16 %v259
    %v1018 = vunpack.c.l.b16 %v260
    %v1019 = vunpack.c.h.b16 %v260
    %v1020 = vunpack.c.l.b16 %v261
    %v1021 = vunpack.c.h.b16 %v261
    %v1022 = vunpack.c.l.b16 %v262
    %v1023 = vunpack.c.h.b16 %v262
    %v1024 = vunpack.c.l.b16 %v263
    %v1025 = vunpack.c.h.b16 %v263
    %v1026 = vunpack.c.l.b16 %v264
    %v1027 = vunpack.c.h.b16 %v264
    %v1028 = vunpack.c.l.b16 %v265
    %v1029 = vunpack.c.h.b16 %v265
    %v1030 = vunpack.c.l.b16 %v266
    %v1031 = vunpack.c.h.b16 %v266
    %v1032 = vunpack.c.l.b16 %v267
    %v1033 = vunpack.c.h.b16 %v267
    %v1034 = vunpack.c.l.b16 %v268
    %v1035 = vunpack.c.h.b16 %v268
    %v1036 = vunpack.c.l.b16 %v269
    %v1037 = vunpack.c.h.b16 %v269
    %v1038 = vunpack.c.l.b16 %v270
    %v1039 = vunpack.c.h.b16 %v270
    %v1040 = vunpack.c.l.b16 %v271
    %v1041 = vunpack.c.h.b16 %v271
    %v1042 = vunpack.c.l.b16 %v272
    %v1043 = vunpack.c.h.b16 %v272
    %v1044 = vunpack.c.l.b16 %v273
    %v1045 = vunpack.c.h.b16 %v273
    %v1046 = vunpack.c.l.b16 %v274
    %v1047 = vunpack.c.h.b16 %v274
    %v1048 = vunpack.c.l.b16 %v275
    %v1049 = vunpack.c.h.b16 %v275
    %v1050 = vunpack.c.l.b16 %v276
    %v1051 = vunpack.c.h.b16 %v276
    %v1052 = vunpack.c.l.b16 %v277
    %v1053 = vunpack.c.h.b16 %v277
    %v1054 = vunpack.c.l.b16 %v278
    %v1055 = vunpack.c.h.b16 %v278
    %v1056 = vunpack.c.l.b16 %v279
    %v1057 = vunpack.c.h.b16 %v279
    %v1058 = vunpack.c.l.b16 %v280
    %v1059 = vunpack.c.h.b16 %v280
    %v1060 = vunpack.c.l.b16 %v281
    %v1061 = vunpack.c.h.b16 %v281
    %v1062 = vunpack.c.l.b16 %v282
    %v1063 = vunpack.c.h.b16 %v282
    %v1064 = vunpack.c.l.b16 %v283
    %v1065 = vunpack.c.h.b16 %v283
    %v1066 = vunpack.c.l.b16 %v284
    %v1067 = vunpack.c.h.b16 %v284
    %v1068 = vunpack.c.l.b16 %v285
    %v1069 = vunpack.c.h.b16 %v285
    %v1070 = vunpack.c.l.b16 %v286
    %v1071 = vunpack.c.h.b16 %v286
    %v1072 = vunpack.c.l.b16 %v287
    %v1073 = vunpack.c.h.b16 %v287
    %v1074 = vunpack.c.l.b16 %v288
    %v1075 = vunpack.c.h.b16 %v288
    %v1076 = vunpack.c.l.b16 %v289
    %v1077 = vunpack.c.h.b16 %v289
    %v1078 = vunpack.c.l.b16 %v290
    %v1079 = vunpack.c.h.b16 %v290
    %v1080 = vunpack.c.l.b16 %v291
    %v1081 = vunpack.c.h.b16 %v291
    %v1082 = vunpack.c.l.b16 %v292
    %v1083 = vunpack.c.h.b16 %v292
    %v1084 = vunpack.c.l.b16 %v293
    %v1085 = vunpack.c.h.b16 %v293
    %v1086 = vunpack.c.l.b16 %v294
    %v1087 = vunpack.c.h.b16 %v294
    %v1088 = vunpack.c.l.b16 %v295
    %v1089 = vunpack.c.h.b16 %v295
    %v1090 = vunpack.c.l.b16 %v296
    %v1091 = vunpack.c.h.b16 %v296
    %v1092 = vunpack.c.l.b16 %v297
    %v1093 = vunpack.c.h.b16 %v297
    %v1094 = vunpack.c.l.b16 %v298
    %v1095 = vunpack.c.h.b16 %v298
    %v1096 = vunpack.c.l.b16 %v299
    %v1097 = vunpack.c.h.b16 %v299
    %v1098 = vunpack.c.l.b16 %v300
    %v1099 = vunpack.c.h.b16 %v300
    %v1100 = vunpack.c.l.b16 %v301
    %v1101 = vunpack.c.h.b16 %v301
    %v1102 = vunpack.c.l.b16 %v302
    %v1103 = vunpack.c.h.b16 %v302
    %v1104 = vunpack.c.l.b16 %v303
    %v1105 = vunpack.c.h.b16 %v303
    %v1106 = vunpack.c.l.b16 %v304
    %v1107 = vunpack.c.h.b16 %v304
    %v1108 = vunpack.c.l.b16 %v305
    %v1109 = vunpack.c.h.b16 %v305
    %v1110 = vunpack.c.l.b16 %v306
    %v1111 = vunpack.c.h.b16 %v306
    %v1112 = vunpack.c.l.b16 %v307
    %v1113 = vunpack.c.h.b16 %v307
    %v1114 = vunpack.c.l.b16 %v308
    %v1115 = vunpack.c.h.b16 %v308
    %v1116 = vunpack.c.l.b16 %v309
    %v1117 = vunpack.c.h.b16 %v309
    %v1118 = vunpack.c.l.b16 %v310
    %v1119 = vunpack.c.h.b16 %v310
    %v1120 = vunpack.c.l.b16 %v311
    %v1121 = vunpack.c.h.b16 %v311
    %v1122 = vunpack.c.l.b16 %v312
    %v1123 = vunpack.c.h.b16 %v312
    %v1124 = vunpack.c.l.b16 %v313
    %v1125 = vunpack.c.h.b16 %v313
    %v1126 = vunpack.c.l.b16 %v314
    %v1127 = vunpack.c.h.b16 %v314
    %v1128 = vunpack.c.l.b16 %v315
    %v1129 = vunpack.c.h.b16 %v315
    %v1130 = vunpack.c.l.b16 %v316
    %v1131 = vunpack.c.h.b16 %v316
    %v1132 = vunpack.c.l.b16 %v317
    %v1133 = vunpack.c.h.b16 %v317
    %v1134 = vunpack.c.l.b16 %v318
    %v1135 = vunpack.c.h.b16 %v318
    %v1136 = vunpack.c.l.b16 %v319
    %v1137 = vunpack.c.h.b16 %v319
    %v1138 = vunpack.c.l.b16 %v320
    %v1139 = vunpack.c.h.b16 %v320
    %v1140 = vunpack.c.l.b16 %v321
    %v1141 = vunpack.c.h.b16 %v321
    %v1142 = vunpack.c.l.b16 %v322
    %v1143 = vunpack.c.h.b16 %v322
    %v1144 = vunpack.c.l.b16 %v323
    %v1145 = vunpack.c.h.b16 %v323
    %v1146 = vunpack.c.l.b16 %v324
    %v1147 = vunpack.c.h.b16 %v324
    %v1148 = vunpack.c.l.b16 %v325
    %v1149 = vunpack.c.h.b16 %v325
    %v1150 = vunpack.c.l.b16 %v326
    %v1151 = vunpack.c.h.b16 %v326
    %v1152 = vunpack.c.l.b16 %v327
    %v1153 = vunpack.c.h.b16 %v327
    %v1154 = vunpack.c.l.b16 %v328
    %v1155 = vunpack.c.h.b16 %v328
    %v1156 = vunpack.c.l.b16 %v329
    %v1157 = vunpack.c.h.b16 %v329
    %v1158 = vunpack.c.l.b16 %v330
    %v1159 = vunpack.c.h.b16 %v330
    %v1160 = vunpack.c.l.b16 %v331
    %v1161 = vunpack.c.h.b16 %v331
    %v1162 = vpack.c.b16 %v654, %v650
    %v1163 = vpack.c.b16 %v655, %v651
    %v1164 = vpack.c.b16 %v656, %v652
    %v1165 = vpack.c.b16 %v657, %v653
    %v1166 = vpack.c.b16 %v662, %v658
    %v1167 = vpack.c.b16 %v663, %v659
    %v1168 = vpack.c.b16 %v664, %v660
    %v1169 = vpack.c.b16 %v665, %v661
    %v1170 = vpack.c.b16 %v670, %v666
    %v1171 = vpack.c.b16 %v671, %v667
    %v1172 = vpack.c.b16 %v672, %v668
    %v1173 = vpack.c.b16 %v673, %v669
    %v1174 = vpack.c.b16 %v678, %v674
    %v1175 = vpack.c.b16 %v679, %v675
    %v1176 = vpack.c.b16 %v680, %v676
    %v1177 = vpack.c.b16 %v681, %v677
    %v1178 = vpack.c.b16 %v686, %v682
    %v1179 = vpack.c.b16 %v687, %v683
    %v1180 = vpack.c.b16 %v688, %v684
    %v1181 = vpack.c.b16 %v689, %v685
    %v1182 = vpack.c.b16 %v694, %v690
    %v1183 = vpack.c.b16 %v695, %v691
    %v1184 = vpack.c.b16 %v696, %v692
    %v1185 = vpack.c.b16 %v697, %v693
    %v1186 = vpack.c.b16 %v702, %v698
    %v1187 = vpack.c.b16 %v703, %v699
    %v1188 = vpack.c.b16 %v704, %v700
    %v1189 = vpack.c.b16 %v705, %v701
    %v1190 = vpack.c.b16 %v710, %v706
    %v1191 = vpack.c.b16 %v711, %v707
    %v1192 = vpack.c.b16 %v712, %v708
    %v1193 = vpack.c.b16 %v713, %v709
    %v1194 = vpack.c.b16 %v718, %v714
    %v1195 = vpack.c.b16 %v719, %v715
    %v1196 = vpack.c.b16 %v720, %v716
    %v1197 = vpack.c.b16 %v721, %v717
    %v1198 = vpack.c.b16 %v726, %v722
    %v1199 = vpack.c.b16 %v727, %v723
    %v1200 = vpack.c.b16 %v728, %v724
    %v1201 = vpack.c.b16 %v729, %v725
    %v1202 = vpack.c.b16 %v734, %v730
    %v1203 = vpack.c.b16 %v735, %v731
    %v1204 = vpack.c.b16 %v736, %v732
    %v1205 = vpack.c.b16 %v737, %v733
    %v1206 = vpack.c.b16 %v742, %v738
    %v1207 = vpack.c.b16 %v743, %v739
    %v1208 = vpack.c.b16 %v744, %v740
    %v1209 = vpack.c.b16 %v745, %v741
    %v1210 = vpack.c.b16 %v750, %v746
    %v1211 = vpack.c.b16 %v751, %v747
    %v1212 = vpack.c.b16 %v752, %v748
    %v1213 = vpack.c.b16 %v753, %v749
    %v1214 = vpack.c.b16 %v758, %v754
    %v1215 = vpack.c.b16 %v759, %v755
    %v1216 = vpack.c.b16 %v760, %v756
    %v1217 = vpack.c.b16 %v761, %v757
    %v1218 = vpack.c.b16 %v766, %v762
    %v1219 = vpack.c.b16 %v767, %v763
    %v1220 = vpack.c.b16 %v768, %v764
    %v1221 = vpack.c.b16 %v769, %v765
    %v1222 = vpack.c.b16 %v774, %v770
    %v1223 = vpack.c.b16 %v775, %v771
    %v1224 = vpack.c.b16 %v776, %v772
    %v1225 = vpack.c.b16 %v777, %v773
    %v1226 = vpack.c.b16 %v782, %v778
    %v1227 = vpack.c.b16 %v783, %v779
    %v1228 = vpack.c.b16 %v784, %v780
    %v1229 = vpack.c.b16 %v785, %v781
    %v1230 = vpack.c.b16 %v790, %v786
    %v1231 = vpack.c.b16 %v791, %v787
    %v1232 = vpack.c.b16 %v792, %v788
    %v1233 = vpack.c.b16 %v793, %v789
    %v1234 = vpack.c.b16 %v798, %v794
    %v1235 = vpack.c.b16 %v799, %v795
    %v1236 = vpack.c.b16 %v800, %v796
    %v1237 = vpack.c.b16 %v801, %v797
    %v1238 = vpack.c.b16 %v806, %v802
    %v1239 = vpack.c.b16 %v807, %v803
    %v1240 = vpack.c.b16 %v808, %v804
    %v1241 = vpack.c.b16 %v809, %v805
    %v1242 = vpack.c.b16 %v814, %v810
    %v1243 = vpack.c.b16 %v815, %v811
    %v1244 = vpack.c.b16 %v816, %v812
    %v1245 = vpack.c.b16 %v817, %v813
    %v1246 = vpack.c.b16 %v822, %v818
    %v1247 = vpack.c.b16 %v823, %v819
    %v1248 = vpack.c.b16 %v824, %v820
    %v1249 = vpack.c.b16 %v825, %v821
    %v1250 = vpack.c.b16 %v830, %v826
    %v1251 = vpack.c.b16 %v831, %v827
    %v1252 = vpack.c.b16 %v832, %v828
    %v1253 = vpack.c.b16 %v833, %v829
    %v1254 = vpack.c.b16 %v838, %v834
    %v1255 = vpack.c.b16 %v839, %v835
    %v1256 = vpack.c.b16 %v840, %v836
    %v1257 = vpack.c.b16 %v841, %v837
    %v1258 = vpack.c.b16 %v846, %v842
    %v1259 = vpack.c.b16 %v847, %v843
    %v1260 = vpack.c.b16 %v848, %v844
    %v1261 = vpack.c.b16 %v849, %v845
    %v1262 = vpack.c.b16 %v854, %v850
    %v1263 = vpack.c.b16 %v855, %v851
    %v1264 = vpack.c.b16 %v856, %v852
    %v1265 = vpack.c.b16 %v857, %v853
    %v1266 = vpack.c.b16 %v862, %v858
    %v1267 = vpack.c.b16 %v863, %v859
    %v1268 = vpack.c.b16 %v864, %v860
    %v1269 = vpack.c.b16 %v865, %v861
    %v1270 = vpack.c.b16 %v870, %v866
    %v1271 = vpack.c.b16 %v871, %v867
    %v1272 = vpack.c.b16 %v872, %v868
    %v1273 = vpack.c.b16 %v873, %v869
    %v1274 = vpack.c.b16 %v878, %v874
    %v1275 = vpack.c.b16 %v879, %v875
    %v1276 = vpack.c.b16 %v880, %v876
    %v1277 = vpack.c.b16 %v881, %v877
    %v1278 = vpack.c.b16 %v886, %v882
    %v1279 = vpack.c.b16 %v887, %v883
    %v1280 = vpack.c.b16 %v888, %v884
    %v1281 = vpack.c.b16 %v889, %v885
    %v1282 = vpack.c.b16 %v894, %v890
    %v1283 = vpack.c.b16 %v895, %v891
    %v1284 = vpack.c.b16 %v896, %v892
    %v1285 = vpack.c.b16 %v897, %v893
    %v1286 = vpack.c.b16 %v902, %v898
    %v1287 = vpack.c.b16 %v903, %v899
    %v1288 = vpack.c.b16 %v904, %v900
    %v1289 = vpack.c.b16 %v905, %v901
    %v1290 = vpack.c.b16 %v910, %v906
    %v1291 = vpack.c.b16 %v911, %v907
    %v1292 = vpack.c.b16 %v912, %v908
    %v1293 = vpack.c.b16 %v913, %v909
    %v1294 = vpack.c.b16 %v918, %v914
    %v1295 = vpack.c.b16 %v919, %v915
    %v1296 = vpack.c.b16 %v920, %v916
    %v1297 = vpack.c.b16 %v921, %v917
    %v1298 = vpack.c.b16 %v926, %v922
    %v1299 = vpack.c.b16 %v927, %v923
    %v1300 = vpack.c.b16 %v928, %v924
    %v1301 = vpack.c.b16 %v929, %v925
    %v1302 = vpack.c.b16 %v934, %v930
    %v1303 = vpack.c.b16 %v935, %v931
    %v1304 = vpack.c.b16 %v936, %v932
    %v1305 = vpack.c.b16 %v937, %v933
    %v1306 = vpack.c.b16 %v942, %v938
    %v1307 = vpack.c.b16 %v943, %v939
    %v1308 = vpack.c.b16 %v944, %v940
    %v1309 = vpack.c.b16 %v945, %v941
    %v1310 = vpack.c.b16 %v950, %v946
    %v1311 = vpack.c.b16 %v951, %v947
    %v1312 = vpack.c.b16 %v952, %v948
    %v1313 = vpack.c.b16 %v953, %v949
    %v1314 = vpack.c.b16 %v958, %v954
    %v1315 = vpack.c.b16 %v959, %v955
    %v1316 = vpack.c.b16 %v960, %v956
    %v1317 = vpack.c.b16 %v961, %v957
    %v1318 = vpack.c.b16 %v966, %v962
    %v1319 = vpack.c.b16 %v967, %v963
    %v1320 = vpack.c.b16 %v968, %v964
    %v1321 = vpack.c.b16 %v969, %v965
    %v1322 = vpack.c.b16 %v974, %v970
    %v1323 = vpack.c.b16 %v975, %v971
    %v1324 = vpack.c.b16 %v976, %v972
    %v1325 = vpack.c.b16 %v977, %v973
    %v1326 = vpack.c.b16 %v982, %v978
    %v1327 = vpack.c.b16 %v983, %v979
    %v1328 = vpack.c.b16 %v984, %v980
    %v1329 = vpack.c.b16 %v985, %v981
    %v1330 = vpack.c.b16 %v990, %v986
    %v1331 = vpack.c.b16 %v991, %v987
    %v1332 = vpack.c.b16 %v992, %v988
    %v1333 = vpack.c.b16 %v993, %v989
    %v1334 = vpack.c.b16 %v998, %v994
    %v1335 = vpack.c.b16 %v999, %v995
    %v1336 = vpack.c.b16 %v1000, %v996
    %v1337 = vpack.c.b16 %v1001, %v997
    %v1338 = vpack.c.b16 %v1006, %v1002
    %v1339 = vpack.c.b16 %v1007, %v1003
    %v1340 = vpack.c.b16 %v1008, %v1004
    %v1341 = vpack.c.b16 %v1009, %v1005
    %v1342 = vpack.c.b16 %v1014, %v1010
    %v1343 = vpack.c.b16 %v1015, %v1011
    %v1344 = vpack.c.b16 %v1016, %v1012
    %v1345 = vpack.c.b16 %v1017, %v1013
    %v1346 = vpack.c.b16 %v1022, %v1018
    %v1347 = vpack.c.b16 %v1023, %v1019
    %v1348 = vpack.c.b16 %v1024, %v1020
    %v1349 = vpack.c.b16 %v1025, %v1021
    %v1350 = vpack.c.b16 %v1030, %v1026
    %v1351 = vpack.c.b16 %v1031, %v1027
    %v1352 = vpack.c.b16 %v1032, %v1028
    %v1353 = vpack.c.b16 %v1033, %v1029
    %v1354 = vpack.c.b16 %v1038, %v1034
    %v1355 = vpack.c.b16 %v1039, %v1035
    %v1356 = vpack.c.b16 %v1040, %v1036
    %v1357 = vpack.c.b16 %v1041, %v1037
    %v1358 = vpack.c.b16 %v1046, %v1042
    %v1359 = vpack.c.b16 %v1047, %v1043
    %v1360 = vpack.c.b16 %v1048, %v1044
    %v1361 = vpack.c.b16 %v1049, %v1045
    %v1362 = vpack.c.b16 %v1054, %v1050
    %v1363 = vpack.c.b16 %v1055, %v1051
    %v1364 = vpack.c.b16 %v1056, %v1052
    %v1365 = vpack.c.b16 %v1057, %v1053
    %v1366 = vpack.c.b16 %v1062, %v1058
    %v1367 = vpack.c.b16 %v1063, %v1059
    %v1368 = vpack.c.b16 %v1064, %v1060
    %v1369 = vpack.c.b16 %v1065, %v1061
    %v1370 = vpack.c.b16 %v1070, %v1066
    %v1371 = vpack.c.b16 %v1071, %v1067
    %v1372 = vpack.c.b16 %v1072, %v1068
    %v1373 = vpack.c.b16 %v1073, %v1069
    %v1374 = vpack.c.b16 %v1078, %v1074
    %v1375 = vpack.c.b16 %v1079, %v1075
    %v1376 = vpack.c.b16 %v1080, %v1076
    %v1377 = vpack.c.b16 %v1081, %v1077
    %v1378 = vpack.c.b16 %v1086, %v1082
    %v1379 = vpack.c.b16 %v1087, %v1083
    %v1380 = vpack.c.b16 %v1088, %v1084
    %v1381 = vpack.c.b16 %v1089, %v1085
    %v1382 = vpack.c.b16 %v1094, %v1090
    %v1383 = vpack.c.b16 %v1095, %v1091
    %v1384 = vpack.c.b16 %v1096, %v1092
    %v1385 = vpack.c.b16 %v1097, %v1093
    %v1386 = vpack.c.b16 %v1102, %v1098
    %v1387 = vpack.c.b16 %v1103, %v1099
    %v1388 = vpack.c.b16 %v1104, %v1100
    %v1389 = vpack.c.b16 %v1105, %v1101
    %v1390 = vpack.c.b16 %v1110, %v1106
    %v1391 = vpack.c.b16 %v1111, %v1107
    %v1392 = vpack.c.b16 %v1112, %v1108
    %v1393 = vpack.c.b16 %v1113, %v1109
    %v1394 = vpack.c.b16 %v1118, %v1114
    %v1395 = vpack.c.b16 %v1119, %v1115
    %v1396 = vpack.c.b16 %v1120, %v1116
    %v1397 = vpack.c.b16 %v1121, %v1117
    %v1398 = vpack.c.b16 %v1126, %v1122
    %v1399 = vpack.c.b16 %v1127, %v1123
    %v1400 = vpack.c.b16 %v1128, %v1124
    %v1401 = vpack.c.b16 %v1129, %v1125
    %v1402 = vpack.c.b16 %v1134, %v1130
    %v1403 = vpack.c.b16 %v1135, %v1131
    %v1404 = vpack.c.b16 %v1136, %v1132
    %v1405 = vpack.c.b16 %v1137, %v1133
    %v1406 = vpack.c.b16 %v1142, %v1138
    %v1407 = vpack.c.b16 %v1143, %v1139
    %v1408 = vpack.c.b16 %v1144, %v1140
    %v1409 = vpack.c.b16 %v1145, %v1141
    %v1410 = vpack.c.b16 %v1150, %v1146
    %v1411 = vpack.c.b16 %v1151, %v1147
    %v1412 = vpack.c.b16 %v1152, %v1148
    %v1413 = vpack.c.b16 %v1153, %v1149
    %v1414 = vpack.c.b16 %v1158, %v1154
    %v1415 = vpack.c.b16 %v1159, %v1155
    %v1416 = vpack.c.b16 %v1160, %v1156
    %v1417 = vpack.c.b16 %v1161, %v1157
    %1674 = vmatprep.subr.bf16.mxu0 %v1163
    %1675 = vmatpush1.bf16.msra.mxu0 %v1162
    %1676 = vmatprep.subr.bf16.mxu0 %v1167
    %1677 = vmatpush1.bf16.msra.mxu0 %v1166
    %1678 = vmatprep.subr.bf16.mxu0 %v1171
    %1679 = vmatpush1.bf16.msra.mxu0 %v1170
    %1680 = vmatprep.subr.bf16.mxu0 %v1175
    %1681 = vmatpush1.bf16.msra.mxu0 %v1174
    %1682 = vmatprep.subr.bf16.mxu0 %v1179
    %1683 = vmatpush1.bf16.msra.mxu0 %v1178
    %1684 = vmatprep.subr.bf16.mxu0 %v1183
    %1685 = vmatpush1.bf16.msra.mxu0 %v1182
    %1686 = vmatprep.subr.bf16.mxu0 %v1187
    %1687 = vmatpush1.bf16.msra.mxu0 %v1186
    %1688 = vmatprep.subr.bf16.mxu0 %v1191
    %1689 = vmatpush1.bf16.msra.mxu0 %v1190
    %1690 = vmatprep.subr.bf16.mxu0 %v1195
    %1691 = vmatpush1.bf16.msra.mxu0 %v1194
    %1692 = vmatprep.subr.bf16.mxu0 %v1199
    %1693 = vmatpush1.bf16.msra.mxu0 %v1198
    %1694 = vmatprep.subr.bf16.mxu0 %v1203
    %1695 = vmatpush1.bf16.msra.mxu0 %v1202
    %1696 = vmatprep.subr.bf16.mxu0 %v1207
    %1697 = vmatpush1.bf16.msra.mxu0 %v1206
    %1698 = vmatprep.subr.bf16.mxu0 %v1211
    %1699 = vmatpush1.bf16.msra.mxu0 %v1210
    %1700 = vmatprep.subr.bf16.mxu0 %v1215
    %1701 = vmatpush1.bf16.msra.mxu0 %v1214
    %1702 = vmatprep.subr.bf16.mxu0 %v1219
    %1703 = vmatpush1.bf16.msra.mxu0 %v1218
    %1704 = vmatprep.subr.bf16.mxu0 %v1223
    %1705 = vmatpush1.bf16.msra.mxu0 %v1222
    %1706 = vmatprep.mubr.bf16.mxu0 %v379
    %1707 = vmatmul.mubr.bf16.gmra.mrb[0].mxu0 %v378
    %v1708 = vpop.f32.mrb[0].mxu0
    %v1709 = vadd.f32 %v337, %v1708
    %v1710 = vpop.f32.mrb[0].mxu0
    %v1711 = vadd.f32 %v341, %v1710
    %v1712 = vpop.f32.mrb[0].mxu0
    %v1713 = vadd.f32 %v337, %v1712
    %v1714 = vpop.f32.mrb[0].mxu0
    %v1715 = vadd.f32 %v341, %v1714
    %1716 = vdwg.mxu0
    %1717 = vmatprep.subr.bf16.mxu0 %v1227
    %1718 = vmatpush1.bf16.msra.mxu0 %v1226
    %1719 = vmatprep.subr.bf16.mxu0 %v1231
    %1720 = vmatpush1.bf16.msra.mxu0 %v1230
    %1721 = vmatprep.subr.bf16.mxu0 %v1235
    %1722 = vmatpush1.bf16.msra.mxu0 %v1234
    %1723 = vmatprep.subr.bf16.mxu0 %v1239
    %1724 = vmatpush1.bf16.msra.mxu0 %v1238
    %1725 = vmatprep.subr.bf16.mxu0 %v1243
    %1726 = vmatpush1.bf16.msra.mxu0 %v1242
    %1727 = vmatprep.subr.bf16.mxu0 %v1247
    %1728 = vmatpush1.bf16.msra.mxu0 %v1246
    %1729 = vmatprep.subr.bf16.mxu0 %v1251
    %1730 = vmatpush1.bf16.msra.mxu0 %v1250
    %1731 = vmatprep.subr.bf16.mxu0 %v1255
    %1732 = vmatpush1.bf16.msra.mxu0 %v1254
    %1733 = vmatprep.subr.bf16.mxu0 %v1259
    %1734 = vmatpush1.bf16.msra.mxu0 %v1258
    %1735 = vmatprep.subr.bf16.mxu0 %v1263
    %1736 = vmatpush1.bf16.msra.mxu0 %v1262
    %1737 = vmatprep.subr.bf16.mxu0 %v1267
    %1738 = vmatpush1.bf16.msra.mxu0 %v1266
    %1739 = vmatprep.subr.bf16.mxu0 %v1271
    %1740 = vmatpush1.bf16.msra.mxu0 %v1270
    %1741 = vmatprep.subr.bf16.mxu0 %v1275
    %1742 = vmatpush1.bf16.msra.mxu0 %v1274
    %1743 = vmatprep.subr.bf16.mxu0 %v1279
    %1744 = vmatpush1.bf16.msra.mxu0 %v1278
    %1745 = vmatprep.subr.bf16.mxu0 %v1283
    %1746 = vmatpush1.bf16.msra.mxu0 %v1282
    %1747 = vmatprep.subr.bf16.mxu0 %v1287
    %1748 = vmatpush1.bf16.msra.mxu0 %v1286
    %1749 = vmatprep.mubr.bf16.mxu0 %v381
    %1750 = vmatmul.mubr.bf16.gmra.mrb[0].mxu0 %v380
    %v1751 = vpop.f32.mrb[0].mxu0
    %v1752 = vadd.f32 %v1709, %v1751
    %v1753 = vpop.f32.mrb[0].mxu0
    %v1754 = vadd.f32 %v1711, %v1753
    %v1755 = vpop.f32.mrb[0].mxu0
    %v1756 = vadd.f32 %v1713, %v1755
    %v1757 = vpop.f32.mrb[0].mxu0
    %v1758 = vadd.f32 %v1715, %v1757
    %1759 = vdwg.mxu0
    %1760 = vmatprep.subr.bf16.mxu0 %v1291
    %1761 = vmatpush1.bf16.msra.mxu0 %v1290
    %1762 = vmatprep.subr.bf16.mxu0 %v1295
    %1763 = vmatpush1.bf16.msra.mxu0 %v1294
    %1764 = vmatprep.subr.bf16.mxu0 %v1299
    %1765 = vmatpush1.bf16.msra.mxu0 %v1298
    %1766 = vmatprep.subr.bf16.mxu0 %v1303
    %1767 = vmatpush1.bf16.msra.mxu0 %v1302
    %1768 = vmatprep.subr.bf16.mxu0 %v1307
    %1769 = vmatpush1.bf16.msra.mxu0 %v1306
    %1770 = vmatprep.subr.bf16.mxu0 %v1311
    %1771 = vmatpush1.bf16.msra.mxu0 %v1310
    %1772 = vmatprep.subr.bf16.mxu0 %v1315
    %1773 = vmatpush1.bf16.msra.mxu0 %v1314
    %1774 = vmatprep.subr.bf16.mxu0 %v1319
    %1775 = vmatpush1.bf16.msra.mxu0 %v1318
    %1776 = vmatprep.subr.bf16.mxu0 %v1323
    %1777 = vmatpush1.bf16.msra.mxu0 %v1322
    %1778 = vmatprep.subr.bf16.mxu0 %v1327
    %1779 = vmatpush1.bf16.msra.mxu0 %v1326
    %1780 = vmatprep.subr.bf16.mxu0 %v1331
    %1781 = vmatpush1.bf16.msra.mxu0 %v1330
    %1782 = vmatprep.subr.bf16.mxu0 %v1335
    %1783 = vmatpush1.bf16.msra.mxu0 %v1334
    %1784 = vmatprep.subr.bf16.mxu0 %v1339
    %1785 = vmatpush1.bf16.msra.mxu0 %v1338
    %1786 = vmatprep.subr.bf16.mxu0 %v1343
    %1787 = vmatpush1.bf16.msra.mxu0 %v1342
    %1788 = vmatprep.subr.bf16.mxu0 %v1347
    %1789 = vmatpush1.bf16.msra.mxu0 %v1346
    %1790 = vmatprep.subr.bf16.mxu0 %v1351
    %1791 = vmatpush1.bf16.msra.mxu0 %v1350
    %1792 = vmatprep.mubr.bf16.mxu0 %v383
    %1793 = vmatmul.mubr.bf16.gmra.mrb[0].mxu0 %v382
    %v1794 = vpop.f32.mrb[0].mxu0
    %v1795 = vadd.f32 %v1752, %v1794
    %v1796 = vpop.f32.mrb[0].mxu0
    %v1797 = vadd.f32 %v1754, %v1796
    %v1798 = vpop.f32.mrb[0].mxu0
    %v1799 = vadd.f32 %v1756, %v1798
    %v1800 = vpop.f32.mrb[0].mxu0
    %v1801 = vadd.f32 %v1758, %v1800
    %1802 = vdwg.mxu0
    %1803 = vmatprep.subr.bf16.mxu0 %v1355
    %1804 = vmatpush1.bf16.msra.mxu0 %v1354
    %1805 = vmatprep.subr.bf16.mxu0 %v1359
    %1806 = vmatpush1.bf16.msra.mxu0 %v1358
    %1807 = vmatprep.subr.bf16.mxu0 %v1363
    %1808 = vmatpush1.bf16.msra.mxu0 %v1362
    %1809 = vmatprep.subr.bf16.mxu0 %v1367
    %1810 = vmatpush1.bf16.msra.mxu0 %v1366
    %1811 = vmatprep.subr.bf16.mxu0 %v1371
    %1812 = vmatpush1.bf16.msra.mxu0 %v1370
    %1813 = vmatprep.subr.bf16.mxu0 %v1375
    %1814 = vmatpush1.bf16.msra.mxu0 %v1374
    %1815 = vmatprep.subr.bf16.mxu0 %v1379
    %1816 = vmatpush1.bf16.msra.mxu0 %v1378
    %1817 = vmatprep.subr.bf16.mxu0 %v1383
    %1818 = vmatpush1.bf16.msra.mxu0 %v1382
    %1819 = vmatprep.subr.bf16.mxu0 %v1387
    %1820 = vmatpush1.bf16.msra.mxu0 %v1386
    %1821 = vmatprep.subr.bf16.mxu0 %v1391
    %1822 = vmatpush1.bf16.msra.mxu0 %v1390
    %1823 = vmatprep.subr.bf16.mxu0 %v1395
    %1824 = vmatpush1.bf16.msra.mxu0 %v1394
    %1825 = vmatprep.subr.bf16.mxu0 %v1399
    %1826 = vmatpush1.bf16.msra.mxu0 %v1398
    %1827 = vmatprep.subr.bf16.mxu0 %v1403
    %1828 = vmatpush1.bf16.msra.mxu0 %v1402
    %1829 = vmatprep.subr.bf16.mxu0 %v1407
    %1830 = vmatpush1.bf16.msra.mxu0 %v1406
    %1831 = vmatprep.subr.bf16.mxu0 %v1411
    %1832 = vmatpush1.bf16.msra.mxu0 %v1410
    %1833 = vmatprep.subr.bf16.mxu0 %v1415
    %1834 = vmatpush1.bf16.msra.mxu0 %v1414
    %1835 = vmatprep.mubr.bf16.mxu0 %v385
    %1836 = vmatmul.mubr.bf16.gmra.mrb[0].mxu0 %v384
    %v1837 = vpop.f32.mrb[0].mxu0
    %v1838 = vadd.f32 %v1795, %v1837
    %v1839 = vpop.f32.mrb[0].mxu0
    %v1840 = vadd.f32 %v1797, %v1839
    %v1841 = vpop.f32.mrb[0].mxu0
    %v1842 = vadd.f32 %v1799, %v1841
    %v1843 = vpop.f32.mrb[0].mxu0
    %v1844 = vadd.f32 %v1801, %v1843
    %1845 = vdwg.mxu0
    %1846 = vmatprep.subr.bf16.mxu0 %v1165
    %1847 = vmatpush1.bf16.msra.mxu0 %v1164
    %1848 = vmatprep.subr.bf16.mxu0 %v1169
    %1849 = vmatpush1.bf16.msra.mxu0 %v1168
    %1850 = vmatprep.subr.bf16.mxu0 %v1173
    %1851 = vmatpush1.bf16.msra.mxu0 %v1172
    %1852 = vmatprep.subr.bf16.mxu0 %v1177
    %1853 = vmatpush1.bf16.msra.mxu0 %v1176
    %1854 = vmatprep.subr.bf16.mxu0 %v1181
    %1855 = vmatpush1.bf16.msra.mxu0 %v1180
    %1856 = vmatprep.subr.bf16.mxu0 %v1185
    %1857 = vmatpush1.bf16.msra.mxu0 %v1184
    %1858 = vmatprep.subr.bf16.mxu0 %v1189
    %1859 = vmatpush1.bf16.msra.mxu0 %v1188
    %1860 = vmatprep.subr.bf16.mxu0 %v1193
    %1861 = vmatpush1.bf16.msra.mxu0 %v1192
    %1862 = vmatprep.subr.bf16.mxu0 %v1197
    %1863 = vmatpush1.bf16.msra.mxu0 %v1196
    %1864 = vmatprep.subr.bf16.mxu0 %v1201
    %1865 = vmatpush1.bf16.msra.mxu0 %v1200
    %1866 = vmatprep.subr.bf16.mxu0 %v1205
    %1867 = vmatpush1.bf16.msra.mxu0 %v1204
    %1868 = vmatprep.subr.bf16.mxu0 %v1209
    %1869 = vmatpush1.bf16.msra.mxu0 %v1208
    %1870 = vmatprep.subr.bf16.mxu0 %v1213
    %1871 = vmatpush1.bf16.msra.mxu0 %v1212
    %1872 = vmatprep.subr.bf16.mxu0 %v1217
    %1873 = vmatpush1.bf16.msra.mxu0 %v1216
    %1874 = vmatprep.subr.bf16.mxu0 %v1221
    %1875 = vmatpush1.bf16.msra.mxu0 %v1220
    %1876 = vmatprep.subr.bf16.mxu0 %v1225
    %1877 = vmatpush1.bf16.msra.mxu0 %v1224
    %1878 = vmatprep.mubr.bf16.mxu0 %v379
    %1879 = vmatmul.mubr.bf16.gmra.mrb[0].mxu0 %v378
    %v1880 = vpop.f32.mrb[0].mxu0
    %v1881 = vadd.f32 %v345, %v1880
    %v1882 = vpop.f32.mrb[0].mxu0
    %v1883 = vadd.f32 %v349, %v1882
    %v1884 = vpop.f32.mrb[0].mxu0
    %v1885 = vadd.f32 %v345, %v1884
    %v1886 = vpop.f32.mrb[0].mxu0
    %v1887 = vadd.f32 %v349, %v1886
    %1888 = vdwg.mxu0
    %1889 = vmatprep.subr.bf16.mxu0 %v1229
    %1890 = vmatpush1.bf16.msra.mxu0 %v1228
    %1891 = vmatprep.subr.bf16.mxu0 %v1233
    %1892 = vmatpush1.bf16.msra.mxu0 %v1232
    %1893 = vmatprep.subr.bf16.mxu0 %v1237
    %1894 = vmatpush1.bf16.msra.mxu0 %v1236
    %1895 = vmatprep.subr.bf16.mxu0 %v1241
    %1896 = vmatpush1.bf16.msra.mxu0 %v1240
    %1897 = vmatprep.subr.bf16.mxu0 %v1245
    %1898 = vmatpush1.bf16.msra.mxu0 %v1244
    %1899 = vmatprep.subr.bf16.mxu0 %v1249
    %1900 = vmatpush1.bf16.msra.mxu0 %v1248
    %1901 = vmatprep.subr.bf16.mxu0 %v1253
    %1902 = vmatpush1.bf16.msra.mxu0 %v1252
    %1903 = vmatprep.subr.bf16.mxu0 %v1257
    %1904 = vmatpush1.bf16.msra.mxu0 %v1256
    %1905 = vmatprep.subr.bf16.mxu0 %v1261
    %1906 = vmatpush1.bf16.msra.mxu0 %v1260
    %1907 = vmatprep.subr.bf16.mxu0 %v1265
    %1908 = vmatpush1.bf16.msra.mxu0 %v1264
    %1909 = vmatprep.subr.bf16.mxu0 %v1269
    %1910 = vmatpush1.bf16.msra.mxu0 %v1268
    %1911 = vmatprep.subr.bf16.mxu0 %v1273
    %1912 = vmatpush1.bf16.msra.mxu0 %v1272
    %1913 = vmatprep.subr.bf16.mxu0 %v1277
    %1914 = vmatpush1.bf16.msra.mxu0 %v1276
    %1915 = vmatprep.subr.bf16.mxu0 %v1281
    %1916 = vmatpush1.bf16.msra.mxu0 %v1280
    %1917 = vmatprep.subr.bf16.mxu0 %v1285
    %1918 = vmatpush1.bf16.msra.mxu0 %v1284
    %1919 = vmatprep.subr.bf16.mxu0 %v1289
    %1920 = vmatpush1.bf16.msra.mxu0 %v1288
    %1921 = vmatprep.mubr.bf16.mxu0 %v381
    %1922 = vmatmul.mubr.bf16.gmra.mrb[0].mxu0 %v380
    %v1923 = vpop.f32.mrb[0].mxu0
    %v1924 = vadd.f32 %v1881, %v1923
    %v1925 = vpop.f32.mrb[0].mxu0
    %v1926 = vadd.f32 %v1883, %v1925
    %v1927 = vpop.f32.mrb[0].mxu0
    %v1928 = vadd.f32 %v1885, %v1927
    %v1929 = vpop.f32.mrb[0].mxu0
    %v1930 = vadd.f32 %v1887, %v1929
    %1931 = vdwg.mxu0
    %1932 = vmatprep.subr.bf16.mxu0 %v1293
    %1933 = vmatpush1.bf16.msra.mxu0 %v1292
    %1934 = vmatprep.subr.bf16.mxu0 %v1297
    %1935 = vmatpush1.bf16.msra.mxu0 %v1296
    %1936 = vmatprep.subr.bf16.mxu0 %v1301
    %1937 = vmatpush1.bf16.msra.mxu0 %v1300
    %1938 = vmatprep.subr.bf16.mxu0 %v1305
    %1939 = vmatpush1.bf16.msra.mxu0 %v1304
    %1940 = vmatprep.subr.bf16.mxu0 %v1309
    %1941 = vmatpush1.bf16.msra.mxu0 %v1308
    %1942 = vmatprep.subr.bf16.mxu0 %v1313
    %1943 = vmatpush1.bf16.msra.mxu0 %v1312
    %1944 = vmatprep.subr.bf16.mxu0 %v1317
    %1945 = vmatpush1.bf16.msra.mxu0 %v1316
    %1946 = vmatprep.subr.bf16.mxu0 %v1321
    %1947 = vmatpush1.bf16.msra.mxu0 %v1320
    %1948 = vmatprep.subr.bf16.mxu0 %v1325
    %1949 = vmatpush1.bf16.msra.mxu0 %v1324
    %1950 = vmatprep.subr.bf16.mxu0 %v1329
    %1951 = vmatpush1.bf16.msra.mxu0 %v1328
    %1952 = vmatprep.subr.bf16.mxu0 %v1333
    %1953 = vmatpush1.bf16.msra.mxu0 %v1332
    %1954 = vmatprep.subr.bf16.mxu0 %v1337
    %1955 = vmatpush1.bf16.msra.mxu0 %v1336
    %1956 = vmatprep.subr.bf16.mxu0 %v1341
    %1957 = vmatpush1.bf16.msra.mxu0 %v1340
    %1958 = vmatprep.subr.bf16.mxu0 %v1345
    %1959 = vmatpush1.bf16.msra.mxu0 %v1344
    %1960 = vmatprep.subr.bf16.mxu0 %v1349
    %1961 = vmatpush1.bf16.msra.mxu0 %v1348
    %1962 = vmatprep.subr.bf16.mxu0 %v1353
    %1963 = vmatpush1.bf16.msra.mxu0 %v1352
    %1964 = vmatprep.mubr.bf16.mxu0 %v383
    %1965 = vmatmul.mubr.bf16.gmra.mrb[0].mxu0 %v382
    %v1966 = vpop.f32.mrb[0].mxu0
    %v1967 = vadd.f32 %v1924, %v1966
    %v1968 = vpop.f32.mrb[0].mxu0
    %v1969 = vadd.f32 %v1926, %v1968
    %v1970 = vpop.f32.mrb[0].mxu0
    %v1971 = vadd.f32 %v1928, %v1970
    %v1972 = vpop.f32.mrb[0].mxu0
    %v1973 = vadd.f32 %v1930, %v1972
    %1974 = vdwg.mxu0
    %1975 = vmatprep.subr.bf16.mxu0 %v1357
    %1976 = vmatpush1.bf16.msra.mxu0 %v1356
    %1977 = vmatprep.subr.bf16.mxu0 %v1361
    %1978 = vmatpush1.bf16.msra.mxu0 %v1360
    %1979 = vmatprep.subr.bf16.mxu0 %v1365
    %1980 = vmatpush1.bf16.msra.mxu0 %v1364
    %1981 = vmatprep.subr.bf16.mxu0 %v1369
    %1982 = vmatpush1.bf16.msra.mxu0 %v1368
    %1983 = vmatprep.subr.bf16.mxu0 %v1373
    %1984 = vmatpush1.bf16.msra.mxu0 %v1372
    %1985 = vmatprep.subr.bf16.mxu0 %v1377
    %1986 = vmatpush1.bf16.msra.mxu0 %v1376
    %1987 = vmatprep.subr.bf16.mxu0 %v1381
    %1988 = vmatpush1.bf16.msra.mxu0 %v1380
    %1989 = vmatprep.subr.bf16.mxu0 %v1385
    %1990 = vmatpush1.bf16.msra.mxu0 %v1384
    %1991 = vmatprep.subr.bf16.mxu0 %v1389
    %1992 = vmatpush1.bf16.msra.mxu0 %v1388
    %1993 = vmatprep.subr.bf16.mxu0 %v1393
    %1994 = vmatpush1.bf16.msra.mxu0 %v1392
    %1995 = vmatprep.subr.bf16.mxu0 %v1397
    %1996 = vmatpush1.bf16.msra.mxu0 %v1396
    %1997 = vmatprep.subr.bf16.mxu0 %v1401
    %1998 = vmatpush1.bf16.msra.mxu0 %v1400
    %1999 = vmatprep.subr.bf16.mxu0 %v1405
    %2000 = vmatpush1.bf16.msra.mxu0 %v1404
    %2001 = vmatprep.subr.bf16.mxu0 %v1409
    %2002 = vmatpush1.bf16.msra.mxu0 %v1408
    %2003 = vmatprep.subr.bf16.mxu0 %v1413
    %2004 = vmatpush1.bf16.msra.mxu0 %v1412
    %2005 = vmatprep.subr.bf16.mxu0 %v1417
    %2006 = vmatpush1.bf16.msra.mxu0 %v1416
    %2007 = vmatprep.mubr.bf16.mxu0 %v385
    %2008 = vmatmul.mubr.bf16.gmra.mrb[0].mxu0 %v384
    %v2009 = vpop.f32.mrb[0].mxu0
    %v2010 = vadd.f32 %v1967, %v2009
    %v2011 = vpop.f32.mrb[0].mxu0
    %v2012 = vadd.f32 %v1969, %v2011
    %v2013 = vpop.f32.mrb[0].mxu0
    %v2014 = vadd.f32 %v1971, %v2013
    %v2015 = vpop.f32.mrb[0].mxu0
    %v2016 = vadd.f32 %v1973, %v2015
    %2017 = vdwg.mxu0
    %vm2018 = vcmp.gt.f32.partialorder %v1838, 0.0
    %vm2019 = vcmp.gt.f32.partialorder %v1840, 0.0
    %vm2020 = vcmp.gt.f32.partialorder %v2010, 0.0
    %vm2021 = vcmp.gt.f32.partialorder %v2012, 0.0
    %vm2022 = vcmp.gt.f32.partialorder %v1842, 0.0
    %vm2023 = vcmp.gt.f32.partialorder %v1844, 0.0
    %vm2024 = vcmp.gt.f32.partialorder %v2014, 0.0
    %vm2025 = vcmp.gt.f32.partialorder %v2016, 0.0
    %v2026 = vmul.f32 %v1838, 0.2
    %v2027 = vmul.f32 %v1840, 0.2
    %v2028 = vmul.f32 %v2010, 0.2
    %v2029 = vmul.f32 %v2012, 0.2
    %v2030 = vmul.f32 %v1842, 0.2
    %v2031 = vmul.f32 %v1844, 0.2
    %v2032 = vmul.f32 %v2014, 0.2
    %v2033 = vmul.f32 %v2016, 0.2
    %v2034 = vsel %vm2018, %v1838, %v2026
    %v2035 = vsel %vm2019, %v1840, %v2027
    %v2036 = vsel %vm2020, %v2010, %v2028
    %v2037 = vsel %vm2021, %v2012, %v2029
    %v2038 = vsel %vm2022, %v1842, %v2030
    %v2039 = vsel %vm2023, %v1844, %v2031
    %v2040 = vsel %vm2024, %v2014, %v2032
    %v2041 = vsel %vm2025, %v2016, %v2033
    %v2042 = vpack.c.bf16 %v2038, %v2034
    %v2043 = vpack.c.bf16 %v2039, %v2035
    %v2044 = vpack.c.bf16 %v2040, %v2036
    %v2045 = vpack.c.bf16 %v2041, %v2037
    %v2046 = vld [vmem:[#allocation7] sm:$0xff]
    %v2047 = vld [vmem:[#allocation7 + $0x8] sm:$0xff]
    %v2048 = vld [vmem:[#allocation7 + $0x10] sm:$0xff]
    %v2049 = vld [vmem:[#allocation7 + $0x18] sm:$0xff]
    %v2050 = vld [vmem:[#allocation7 + $0x20] sm:$0xff]
    %v2051 = vld [vmem:[#allocation7 + $0x28] sm:$0xff]
    %v2052 = vld [vmem:[#allocation7 + $0x30] sm:$0xff]
    %v2053 = vld [vmem:[#allocation7 + $0x38] sm:$0xff]
    %v2054 = vld [vmem:[#allocation7 + $0x40] sm:$0xff]
    %v2055 = vld [vmem:[#allocation7 + $0x48] sm:$0xff]
    %v2056 = vld [vmem:[#allocation7 + $0x50] sm:$0xff]
    %v2057 = vld [vmem:[#allocation7 + $0x58] sm:$0xff]
    %v2058 = vld [vmem:[#allocation7 + $0x60] sm:$0xff]
    %v2059 = vld [vmem:[#allocation7 + $0x68] sm:$0xff]
    %v2060 = vld [vmem:[#allocation7 + $0x70] sm:$0xff]
    %v2061 = vld [vmem:[#allocation7 + $0x78] sm:$0xff]
    %v2062 = vld [vmem:[#allocation7 + $0x80] sm:$0xff]
    %v2063 = vld [vmem:[#allocation7 + $0x88] sm:$0xff]
    %v2064 = vld [vmem:[#allocation7 + $0x90] sm:$0xff]
    %v2065 = vld [vmem:[#allocation7 + $0x98] sm:$0xff]
    %v2066 = vld [vmem:[#allocation7 + $0xa0] sm:$0xff]
    %v2067 = vld [vmem:[#allocation7 + $0xa8] sm:$0xff]
    %v2068 = vld [vmem:[#allocation7 + $0xb0] sm:$0xff]
    %v2069 = vld [vmem:[#allocation7 + $0xb8] sm:$0xff]
    %v2070 = vld [vmem:[#allocation7 + $0xc0] sm:$0xff]
    %v2071 = vld [vmem:[#allocation7 + $0xc8] sm:$0xff]
    %v2072 = vld [vmem:[#allocation7 + $0xd0] sm:$0xff]
    %v2073 = vld [vmem:[#allocation7 + $0xd8] sm:$0xff]
    %v2074 = vld [vmem:[#allocation7 + $0xe0] sm:$0xff]
    %v2075 = vld [vmem:[#allocation7 + $0xe8] sm:$0xff]
    %v2076 = vld [vmem:[#allocation7 + $0xf0] sm:$0xff]
    %v2077 = vld [vmem:[#allocation7 + $0xf8] sm:$0xff]
    %v2078 = vld [vmem:[#allocation7 + $0x100] sm:$0xff]
    %v2079 = vld [vmem:[#allocation7 + $0x108] sm:$0xff]
    %v2080 = vld [vmem:[#allocation7 + $0x110] sm:$0xff]
    %v2081 = vld [vmem:[#allocation7 + $0x118] sm:$0xff]
    %v2082 = vld [vmem:[#allocation7 + $0x120] sm:$0xff]
    %v2083 = vld [vmem:[#allocation7 + $0x128] sm:$0xff]
    %v2084 = vld [vmem:[#allocation7 + $0x130] sm:$0xff]
    %v2085 = vld [vmem:[#allocation7 + $0x138] sm:$0xff]
    %v2086 = vld [vmem:[#allocation7 + $0x140] sm:$0xff]
    %v2087 = vld [vmem:[#allocation7 + $0x148] sm:$0xff]
    %v2088 = vld [vmem:[#allocation7 + $0x150] sm:$0xff]
    %v2089 = vld [vmem:[#allocation7 + $0x158] sm:$0xff]
    %v2090 = vld [vmem:[#allocation7 + $0x160] sm:$0xff]
    %v2091 = vld [vmem:[#allocation7 + $0x168] sm:$0xff]
    %v2092 = vld [vmem:[#allocation7 + $0x170] sm:$0xff]
    %v2093 = vld [vmem:[#allocation7 + $0x178] sm:$0xff]
    %v2094 = vld [vmem:[#allocation7 + $0x180] sm:$0xff]
    %v2095 = vld [vmem:[#allocation7 + $0x188] sm:$0xff]
    %v2096 = vld [vmem:[#allocation7 + $0x190] sm:$0xff]
    %v2097 = vld [vmem:[#allocation7 + $0x198] sm:$0xff]
    %v2098 = vld [vmem:[#allocation7 + $0x1a0] sm:$0xff]
    %v2099 = vld [vmem:[#allocation7 + $0x1a8] sm:$0xff]
    %v2100 = vld [vmem:[#allocation7 + $0x1b0] sm:$0xff]
    %v2101 = vld [vmem:[#allocation7 + $0x1b8] sm:$0xff]
    %v2102 = vld [vmem:[#allocation7 + $0x1c0] sm:$0xff]
    %v2103 = vld [vmem:[#allocation7 + $0x1c8] sm:$0xff]
    %v2104 = vld [vmem:[#allocation7 + $0x1d0] sm:$0xff]
    %v2105 = vld [vmem:[#allocation7 + $0x1d8] sm:$0xff]
    %v2106 = vld [vmem:[#allocation7 + $0x1e0] sm:$0xff]
    %v2107 = vld [vmem:[#allocation7 + $0x1e8] sm:$0xff]
    %v2108 = vld [vmem:[#allocation7 + $0x1f0] sm:$0xff]
    %v2109 = vld [vmem:[#allocation7 + $0x1f8] sm:$0xff]
    %v2110 = vld [vmem:[%s4] sm:$0x3]
    %v2112 = vlaneseq
    %v2113 = vshrl.u32 %v2112, 7
    %v2114 = vsub.s32 0, %v2113
    %v2115 = vrot.slane %v2110, %v2114
    %v2116 = vlaneseq
    %v2117 = vshrl.u32 %v2116, 7
    %v2118 = vsub.s32 1, %v2117
    %v2119 = vrot.slane %v2110, %v2118
    %v2186 = vunpack.c.l.b16 %v2046
    %v2187 = vunpack.c.h.b16 %v2046
    %v2188 = vunpack.c.l.b16 %v2047
    %v2189 = vunpack.c.h.b16 %v2047
    %v2190 = vunpack.c.l.b16 %v2048
    %v2191 = vunpack.c.h.b16 %v2048
    %v2192 = vunpack.c.l.b16 %v2049
    %v2193 = vunpack.c.h.b16 %v2049
    %v2194 = vunpack.c.l.b16 %v2050
    %v2195 = vunpack.c.h.b16 %v2050
    %v2196 = vunpack.c.l.b16 %v2051
    %v2197 = vunpack.c.h.b16 %v2051
    %v2198 = vunpack.c.l.b16 %v2052
    %v2199 = vunpack.c.h.b16 %v2052
    %v2200 = vunpack.c.l.b16 %v2053
    %v2201 = vunpack.c.h.b16 %v2053
    %v2202 = vunpack.c.l.b16 %v2054
    %v2203 = vunpack.c.h.b16 %v2054
    %v2204 = vunpack.c.l.b16 %v2055
    %v2205 = vunpack.c.h.b16 %v2055
    %v2206 = vunpack.c.l.b16 %v2056
    %v2207 = vunpack.c.h.b16 %v2056
    %v2208 = vunpack.c.l.b16 %v2057
    %v2209 = vunpack.c.h.b16 %v2057
    %v2210 = vunpack.c.l.b16 %v2058
    %v2211 = vunpack.c.h.b16 %v2058
    %v2212 = vunpack.c.l.b16 %v2059
    %v2213 = vunpack.c.h.b16 %v2059
    %v2214 = vunpack.c.l.b16 %v2060
    %v2215 = vunpack.c.h.b16 %v2060
    %v2216 = vunpack.c.l.b16 %v2061
    %v2217 = vunpack.c.h.b16 %v2061
    %v2218 = vunpack.c.l.b16 %v2062
    %v2219 = vunpack.c.h.b16 %v2062
    %v2220 = vunpack.c.l.b16 %v2063
    %v2221 = vunpack.c.h.b16 %v2063
    %v2222 = vunpack.c.l.b16 %v2064
    %v2223 = vunpack.c.h.b16 %v2064
    %v2224 = vunpack.c.l.b16 %v2065
    %v2225 = vunpack.c.h.b16 %v2065
    %v2226 = vunpack.c.l.b16 %v2066
    %v2227 = vunpack.c.h.b16 %v2066
    %v2228 = vunpack.c.l.b16 %v2067
    %v2229 = vunpack.c.h.b16 %v2067
    %v2230 = vunpack.c.l.b16 %v2068
    %v2231 = vunpack.c.h.b16 %v2068
    %v2232 = vunpack.c.l.b16 %v2069
    %v2233 = vunpack.c.h.b16 %v2069
    %v2234 = vunpack.c.l.b16 %v2070
    %v2235 = vunpack.c.h.b16 %v2070
    %v2236 = vunpack.c.l.b16 %v2071
    %v2237 = vunpack.c.h.b16 %v2071
    %v2238 = vunpack.c.l.b16 %v2072
    %v2239 = vunpack.c.h.b16 %v2072
    %v2240 = vunpack.c.l.b16 %v2073
    %v2241 = vunpack.c.h.b16 %v2073
    %v2242 = vunpack.c.l.b16 %v2074
    %v2243 = vunpack.c.h.b16 %v2074
    %v2244 = vunpack.c.l.b16 %v2075
    %v2245 = vunpack.c.h.b16 %v2075
    %v2246 = vunpack.c.l.b16 %v2076
    %v2247 = vunpack.c.h.b16 %v2076
    %v2248 = vunpack.c.l.b16 %v2077
    %v2249 = vunpack.c.h.b16 %v2077
    %v2250 = vunpack.c.l.b16 %v2078
    %v2251 = vunpack.c.h.b16 %v2078
    %v2252 = vunpack.c.l.b16 %v2079
    %v2253 = vunpack.c.h.b16 %v2079
    %v2254 = vunpack.c.l.b16 %v2080
    %v2255 = vunpack.c.h.b16 %v2080
    %v2256 = vunpack.c.l.b16 %v2081
    %v2257 = vunpack.c.h.b16 %v2081
    %v2258 = vunpack.c.l.b16 %v2082
    %v2259 = vunpack.c.h.b16 %v2082
    %v2260 = vunpack.c.l.b16 %v2083
    %v2261 = vunpack.c.h.b16 %v2083
    %v2262 = vunpack.c.l.b16 %v2084
    %v2263 = vunpack.c.h.b16 %v2084
    %v2264 = vunpack.c.l.b16 %v2085
    %v2265 = vunpack.c.h.b16 %v2085
    %v2266 = vunpack.c.l.b16 %v2086
    %v2267 = vunpack.c.h.b16 %v2086
    %v2268 = vunpack.c.l.b16 %v2087
    %v2269 = vunpack.c.h.b16 %v2087
    %v2270 = vunpack.c.l.b16 %v2088
    %v2271 = vunpack.c.h.b16 %v2088
    %v2272 = vunpack.c.l.b16 %v2089
    %v2273 = vunpack.c.h.b16 %v2089
    %v2274 = vunpack.c.l.b16 %v2090
    %v2275 = vunpack.c.h.b16 %v2090
    %v2276 = vunpack.c.l.b16 %v2091
    %v2277 = vunpack.c.h.b16 %v2091
    %v2278 = vunpack.c.l.b16 %v2092
    %v2279 = vunpack.c.h.b16 %v2092
    %v2280 = vunpack.c.l.b16 %v2093
    %v2281 = vunpack.c.h.b16 %v2093
    %v2282 = vunpack.c.l.b16 %v2094
    %v2283 = vunpack.c.h.b16 %v2094
    %v2284 = vunpack.c.l.b16 %v2095
    %v2285 = vunpack.c.h.b16 %v2095
    %v2286 = vunpack.c.l.b16 %v2096
    %v2287 = vunpack.c.h.b16 %v2096
    %v2288 = vunpack.c.l.b16 %v2097
    %v2289 = vunpack.c.h.b16 %v2097
    %v2290 = vunpack.c.l.b16 %v2098
    %v2291 = vunpack.c.h.b16 %v2098
    %v2292 = vunpack.c.l.b16 %v2099
    %v2293 = vunpack.c.h.b16 %v2099
    %v2294 = vunpack.c.l.b16 %v2100
    %v2295 = vunpack.c.h.b16 %v2100
    %v2296 = vunpack.c.l.b16 %v2101
    %v2297 = vunpack.c.h.b16 %v2101
    %v2298 = vunpack.c.l.b16 %v2102
    %v2299 = vunpack.c.h.b16 %v2102
    %v2300 = vunpack.c.l.b16 %v2103
    %v2301 = vunpack.c.h.b16 %v2103
    %v2302 = vunpack.c.l.b16 %v2104
    %v2303 = vunpack.c.h.b16 %v2104
    %v2304 = vunpack.c.l.b16 %v2105
    %v2305 = vunpack.c.h.b16 %v2105
    %v2306 = vunpack.c.l.b16 %v2106
    %v2307 = vunpack.c.h.b16 %v2106
    %v2308 = vunpack.c.l.b16 %v2107
    %v2309 = vunpack.c.h.b16 %v2107
    %v2310 = vunpack.c.l.b16 %v2108
    %v2311 = vunpack.c.h.b16 %v2108
    %v2312 = vunpack.c.l.b16 %v2109
    %v2313 = vunpack.c.h.b16 %v2109
    %v2314 = vpack.c.b16 %v2188, %v2186
    %v2315 = vpack.c.b16 %v2189, %v2187
    %v2316 = vpack.c.b16 %v2192, %v2190
    %v2317 = vpack.c.b16 %v2193, %v2191
    %v2318 = vpack.c.b16 %v2196, %v2194
    %v2319 = vpack.c.b16 %v2197, %v2195
    %v2320 = vpack.c.b16 %v2200, %v2198
    %v2321 = vpack.c.b16 %v2201, %v2199
    %v2322 = vpack.c.b16 %v2204, %v2202
    %v2323 = vpack.c.b16 %v2205, %v2203
    %v2324 = vpack.c.b16 %v2208, %v2206
    %v2325 = vpack.c.b16 %v2209, %v2207
    %v2326 = vpack.c.b16 %v2212, %v2210
    %v2327 = vpack.c.b16 %v2213, %v2211
    %v2328 = vpack.c.b16 %v2216, %v2214
    %v2329 = vpack.c.b16 %v2217, %v2215
    %v2330 = vpack.c.b16 %v2220, %v2218
    %v2331 = vpack.c.b16 %v2221, %v2219
    %v2332 = vpack.c.b16 %v2224, %v2222
    %v2333 = vpack.c.b16 %v2225, %v2223
    %v2334 = vpack.c.b16 %v2228, %v2226
    %v2335 = vpack.c.b16 %v2229, %v2227
    %v2336 = vpack.c.b16 %v2232, %v2230
    %v2337 = vpack.c.b16 %v2233, %v2231
    %v2338 = vpack.c.b16 %v2236, %v2234
    %v2339 = vpack.c.b16 %v2237, %v2235
    %v2340 = vpack.c.b16 %v2240, %v2238
    %v2341 = vpack.c.b16 %v2241, %v2239
    %v2342 = vpack.c.b16 %v2244, %v2242
    %v2343 = vpack.c.b16 %v2245, %v2243
    %v2344 = vpack.c.b16 %v2248, %v2246
    %v2345 = vpack.c.b16 %v2249, %v2247
    %v2346 = vpack.c.b16 %v2252, %v2250
    %v2347 = vpack.c.b16 %v2253, %v2251
    %v2348 = vpack.c.b16 %v2256, %v2254
    %v2349 = vpack.c.b16 %v2257, %v2255
    %v2350 = vpack.c.b16 %v2260, %v2258
    %v2351 = vpack.c.b16 %v2261, %v2259
    %v2352 = vpack.c.b16 %v2264, %v2262
    %v2353 = vpack.c.b16 %v2265, %v2263
    %v2354 = vpack.c.b16 %v2268, %v2266
    %v2355 = vpack.c.b16 %v2269, %v2267
    %v2356 = vpack.c.b16 %v2272, %v2270
    %v2357 = vpack.c.b16 %v2273, %v2271
    %v2358 = vpack.c.b16 %v2276, %v2274
    %v2359 = vpack.c.b16 %v2277, %v2275
    %v2360 = vpack.c.b16 %v2280, %v2278
    %v2361 = vpack.c.b16 %v2281, %v2279
    %v2362 = vpack.c.b16 %v2284, %v2282
    %v2363 = vpack.c.b16 %v2285, %v2283
    %v2364 = vpack.c.b16 %v2288, %v2286
    %v2365 = vpack.c.b16 %v2289, %v2287
    %v2366 = vpack.c.b16 %v2292, %v2290
    %v2367 = vpack.c.b16 %v2293, %v2291
    %v2368 = vpack.c.b16 %v2296, %v2294
    %v2369 = vpack.c.b16 %v2297, %v2295
    %v2370 = vpack.c.b16 %v2300, %v2298
    %v2371 = vpack.c.b16 %v2301, %v2299
    %v2372 = vpack.c.b16 %v2304, %v2302
    %v2373 = vpack.c.b16 %v2305, %v2303
    %v2374 = vpack.c.b16 %v2308, %v2306
    %v2375 = vpack.c.b16 %v2309, %v2307
    %v2376 = vpack.c.b16 %v2312, %v2310
    %v2377 = vpack.c.b16 %v2313, %v2311
    %2442 = vmatprep.subr.bf16.mxu0 %v2315
    %2443 = vmatpush1.bf16.msra.mxu0 %v2314
    %2444 = vmatprep.subr.bf16.mxu0 %v2317
    %2445 = vmatpush1.bf16.msra.mxu0 %v2316
    %2446 = vmatprep.subr.bf16.mxu0 %v2319
    %2447 = vmatpush1.bf16.msra.mxu0 %v2318
    %2448 = vmatprep.subr.bf16.mxu0 %v2321
    %2449 = vmatpush1.bf16.msra.mxu0 %v2320
    %2450 = vmatprep.subr.bf16.mxu0 %v2323
    %2451 = vmatpush1.bf16.msra.mxu0 %v2322
    %2452 = vmatprep.subr.bf16.mxu0 %v2325
    %2453 = vmatpush1.bf16.msra.mxu0 %v2324
    %2454 = vmatprep.subr.bf16.mxu0 %v2327
    %2455 = vmatpush1.bf16.msra.mxu0 %v2326
    %2456 = vmatprep.subr.bf16.mxu0 %v2329
    %2457 = vmatpush1.bf16.msra.mxu0 %v2328
    %2458 = vmatprep.subr.bf16.mxu0 %v2331
    %2459 = vmatpush1.bf16.msra.mxu0 %v2330
    %2460 = vmatprep.subr.bf16.mxu0 %v2333
    %2461 = vmatpush1.bf16.msra.mxu0 %v2332
    %2462 = vmatprep.subr.bf16.mxu0 %v2335
    %2463 = vmatpush1.bf16.msra.mxu0 %v2334
    %2464 = vmatprep.subr.bf16.mxu0 %v2337
    %2465 = vmatpush1.bf16.msra.mxu0 %v2336
    %2466 = vmatprep.subr.bf16.mxu0 %v2339
    %2467 = vmatpush1.bf16.msra.mxu0 %v2338
    %2468 = vmatprep.subr.bf16.mxu0 %v2341
    %2469 = vmatpush1.bf16.msra.mxu0 %v2340
    %2470 = vmatprep.subr.bf16.mxu0 %v2343
    %2471 = vmatpush1.bf16.msra.mxu0 %v2342
    %2472 = vmatprep.subr.bf16.mxu0 %v2345
    %2473 = vmatpush1.bf16.msra.mxu0 %v2344
    %2474 = vmatprep.mubr.bf16.mxu0 %v2043
    %2475 = vmatmul.mubr.bf16.gmra.mrb[0].mxu0 %v2042
    %v2476 = vpop.f32.mrb[0].mxu0
    %v2477 = vadd.f32 %v2115, %v2476
    %v2478 = vpop.f32.mrb[0].mxu0
    %v2479 = vadd.f32 %v2119, %v2478
    %v2480 = vpop.f32.mrb[0].mxu0
    %v2481 = vadd.f32 %v2115, %v2480
    %v2482 = vpop.f32.mrb[0].mxu0
    %v2483 = vadd.f32 %v2119, %v2482
    %2484 = vdwg.mxu0
    %2485 = vmatprep.subr.bf16.mxu0 %v2347
    %2486 = vmatpush1.bf16.msra.mxu0 %v2346
    %2487 = vmatprep.subr.bf16.mxu0 %v2349
    %2488 = vmatpush1.bf16.msra.mxu0 %v2348
    %2489 = vmatprep.subr.bf16.mxu0 %v2351
    %2490 = vmatpush1.bf16.msra.mxu0 %v2350
    %2491 = vmatprep.subr.bf16.mxu0 %v2353
    %2492 = vmatpush1.bf16.msra.mxu0 %v2352
    %2493 = vmatprep.subr.bf16.mxu0 %v2355
    %2494 = vmatpush1.bf16.msra.mxu0 %v2354
    %2495 = vmatprep.subr.bf16.mxu0 %v2357
    %2496 = vmatpush1.bf16.msra.mxu0 %v2356
    %2497 = vmatprep.subr.bf16.mxu0 %v2359
    %2498 = vmatpush1.bf16.msra.mxu0 %v2358
    %2499 = vmatprep.subr.bf16.mxu0 %v2361
    %2500 = vmatpush1.bf16.msra.mxu0 %v2360
    %2501 = vmatprep.subr.bf16.mxu0 %v2363
    %2502 = vmatpush1.bf16.msra.mxu0 %v2362
    %2503 = vmatprep.subr.bf16.mxu0 %v2365
    %2504 = vmatpush1.bf16.msra.mxu0 %v2364
    %2505 = vmatprep.subr.bf16.mxu0 %v2367
    %2506 = vmatpush1.bf16.msra.mxu0 %v2366
    %2507 = vmatprep.subr.bf16.mxu0 %v2369
    %2508 = vmatpush1.bf16.msra.mxu0 %v2368
    %2509 = vmatprep.subr.bf16.mxu0 %v2371
    %2510 = vmatpush1.bf16.msra.mxu0 %v2370
    %2511 = vmatprep.subr.bf16.mxu0 %v2373
    %2512 = vmatpush1.bf16.msra.mxu0 %v2372
    %2513 = vmatprep.subr.bf16.mxu0 %v2375
    %2514 = vmatpush1.bf16.msra.mxu0 %v2374
    %2515 = vmatprep.subr.bf16.mxu0 %v2377
    %2516 = vmatpush1.bf16.msra.mxu0 %v2376
    %2517 = vmatprep.mubr.bf16.mxu0 %v2045
    %2518 = vmatmul.mubr.bf16.gmra.mrb[0].mxu0 %v2044
    %v2519 = vpop.f32.mrb[0].mxu0
    %v2520 = vadd.f32 %v2477, %v2519
    %v2521 = vpop.f32.mrb[0].mxu0
    %v2522 = vadd.f32 %v2479, %v2521
    %v2523 = vpop.f32.mrb[0].mxu0
    %v2524 = vadd.f32 %v2481, %v2523
    %v2525 = vpop.f32.mrb[0].mxu0
    %v2526 = vadd.f32 %v2483, %v2525
    %2527 = vdwg.mxu0
    %vm2528 = vcmp.gt.f32.partialorder %v2520, 0.0
    %vm2529 = vcmp.gt.f32.partialorder %v2522, 0.0
    %vm2530 = vcmp.gt.f32.partialorder %v2524, 0.0
    %vm2531 = vcmp.gt.f32.partialorder %v2526, 0.0
    %v2532 = vmul.f32 %v2520, 0.2
    %v2533 = vmul.f32 %v2522, 0.2
    %v2534 = vmul.f32 %v2524, 0.2
    %v2535 = vmul.f32 %v2526, 0.2
    %v2536 = vsel %vm2528, %v2520, %v2532
    %v2537 = vsel %vm2529, %v2522, %v2533
    %v2538 = vsel %vm2530, %v2524, %v2534
    %v2539 = vsel %vm2531, %v2526, %v2535
    %v2540 = vld [vmem:[%s5] sm:$0x3]
    %v2542 = vlaneseq
    %v2543 = vshrl.u32 %v2542, 7
    %v2544 = vsub.s32 0, %v2543
    %v2545 = vrot.slane %v2540, %v2544
    %v2546 = vlaneseq
    %v2547 = vshrl.u32 %v2546, 7
    %v2548 = vsub.s32 1, %v2547
    %v2549 = vrot.slane %v2540, %v2548
    %v2552 = vmul.f32 %v2536, %v2545
    %v2553 = vmul.f32 %v2537, %v2549
    %v2554 = vmul.f32 %v2538, %v2545
    %v2555 = vmul.f32 %v2539, %v2549
    %v2556 = vadd.f32 %v2552, %v2553
    %2557 = vadd.xlane.f32.xlu0 %v2556
    %v2558 = vpop.xlane.xlu0 %2557
    %v2559 = vadd.f32 %v2554, %v2555
    %2560 = vadd.xlane.f32.xlu0 %v2559
    %v2561 = vpop.xlane.xlu0 %2560
    %s2562 = sld [smem:[#allocation2]]
    %v2563 = vstv %s2562
    %v2564 = vadd.f32 %v2558, %v2563
    %v2565 = vadd.f32 %v2561, %v2563
    %v2566 = vsub.f32 0.0, %v2564
    %v2567 = vsub.f32 0.0, %v2565
    %v2568 = vmul.f32 %v2566, 1.442695
    %v2569 = vpow.pop %v2568
    %v2570 = vmul.f32 %v2567, 1.442695
    %v2571 = vpow.pop %v2570
    %v2572 = vadd.f32 %v2569, 1.0
    %v2573 = vadd.f32 %v2571, 1.0
    %v2574 = vrcp.pop %v2572
    %v2575 = vrcp.pop %v2573
    %vm2576 = vcmask 7168
    %2577 = vst.msk [vmem:[%s7] sm:$0xff] %vm2576, %v2574
    %2578 = vst.msk [vmem:[%s7 + $0x8] sm:$0xff] %vm2576, %v2575
    // Predicated region
    $region42: #{tpu_custom_call.1} parent=1 // pred_check
      _
    $region43: #{tpu_custom_call.1} parent=1 // pred_check_branch
      %2580 = sbr.rel (0) target = $region45
    $region44: #{tpu_custom_call.1} parent=1 // pred_region
      _
    $region45: #{tpu_custom_call.1} parent=1 // pred_fallthru
      _
    // Predicated region
    $region46: #{tpu_custom_call.1} parent=1 // pred_check
      _
    $region47: #{tpu_custom_call.1} parent=1 // pred_check_branch
      %2582 = sbr.rel (0) target = $region49
    $region48: #{tpu_custom_call.1} parent=1 // pred_region
      _
    $region49: #{tpu_custom_call.1} parent=1 // pred_fallthru
      _
    %2583 = vsyncpa [#allocation4], 1
    %2584 = vsyncpa [#allocation6], 1

</llo_original>
